<compile_context>
chip_gen: v6e
topology: v6e:2x2x1
jax: 0.10.0
libtpu: 0.0.40
codegen_flags: <defaults>
</compile_context>

<pallas_src>
import functools

import jax
import jax.numpy as jnp
from jax.experimental import pallas as pl
from jax.experimental.pallas import tpu as pltpu

LANES = 128


def _tree_sum(terms):
    """Balanced-tree sum (shorter dependency chain than a left-fold)."""
    terms = list(terms)
    while len(terms) > 1:
        nxt = [terms[i] + terms[i + 1] for i in range(0, len(terms) - 1, 2)]
        if len(terms) % 2:
            nxt.append(terms[-1])
        terms = nxt
    return terms[0]


# ------------------------------ fused Pallas kernel ------------------------------ #

def _gae_kernel(slab_ref, x_ref, o_ref, *, layout, N0, N1, NZ, K):
    """Whole GraphAutoencoder forward for one sample (grid axis = batch).

    All weights / folded graph operators live in one packed (rows, 128) VMEM slab and
    are read with static slices; every intermediate stays in vregs.
    """

    def piece(name):
        r, nr, nc = layout[name]
        return slab_ref[r:r + nr, :nc]

    def dot(a, b):
        return jnp.dot(a, b, preferred_element_type=jnp.float32)

    bias = piece("bias")                                    # (6, 128)
    x0 = x_ref[0]                                           # (N0, 3)

    # ---- encoder conv 0: Cheb(L0), 3 -> 16, relu.  Fin = 3, so the weight application
    # ---- runs on the VPU as 9 outer-product FMAs instead of near-empty MXU pushes.
    t0 = dot(piece("big_e0"), x0)                           # (K*N0, 3)
    wc0 = piece("wc0")                                      # (K*3, 16)
    terms = []
    for k in range(K):
        tk = t0[k * N0:(k + 1) * N0, :]
        for f in range(3):
            terms.append(tk[:, f:f + 1] * wc0[k * 3 + f:k * 3 + f + 1, :])
    x1 = jnp.maximum(_tree_sum(terms) + bias[0:1, :16], 0.0)          # (N0, 16)

    # ---- encoder conv 1: pool D0 folded into the Cheb(L1) basis, 16 -> 32, relu
    t1 = dot(piece("big_e1"), x1)                           # (K*N1, 16)
    wc1 = piece("wc1")                                      # (K*16, 32)
    x2 = jnp.maximum(
        _tree_sum([dot(t1[k * N1:(k + 1) * N1, :], wc1[k * 16:(k + 1) * 16, :])
                   for k in range(K)]) + bias[1:2, :32], 0.0)          # (N1, 32)

    # ---- pool D1 + flatten + enc_lin: one pool dot + NZ independent dots, tree-summed
    pooled = dot(piece("d1"), x2)                           # (NZ, 32)
    wencT = piece("wencT")                                  # (NZ*32, z)
    z = _tree_sum([dot(pooled[j:j + 1, :], wencT[j * 32:(j + 1) * 32, :])
                   for j in range(NZ)]) + bias[2:3, :8]     # (1, z)

    # ---- dec_lin + relu: one lane-dense (1, z) @ (z, 128) dot
    d = jnp.maximum(dot(z, piece("wdecT")) + bias[3:4, :], 0.0)       # (1, NZ*32)

    # ---- decoder conv 0: unflatten + upsample U1 + Cheb(L1) basis via NZ outer-product
    # ---- FMAs on the VPU (contraction dim is only NZ = 4), then 16->32... 32->32 conv.
    big_d0 = piece("big_d0")                                # (K*N1, NZ)
    td = _tree_sum([big_d0[:, m:m + 1] * d[:, m * 32:(m + 1) * 32] for m in range(NZ)])
    wd0 = piece("wd0")                                      # (K*32, 32)
    y1 = jnp.maximum(
        _tree_sum([dot(td[k * N1:(k + 1) * N1, :], wd0[k * 32:(k + 1) * 32, :])
                   for k in range(K)]) + bias[4:5, :32], 0.0)          # (N1, 32)

    # ---- decoder conv 1: upsample U0 folded into the Cheb(L0) basis, 32 -> 16, relu
    t2 = dot(piece("big_d1"), y1)                           # (K*N0, 32)
    wd1 = piece("wd1")                                      # (K*32, 16)
    y2 = jnp.maximum(
        _tree_sum([dot(t2[k * N0:(k + 1) * N0, :], wd1[k * 32:(k + 1) * 32, :])
                   for k in range(K)]) + bias[5:6, :16], 0.0)          # (N0, 16)

    # ---- final conv: Cheb(L0), 16 -> 3, no bias, no relu (basis reused from big_e0)
    t3 = dot(piece("big_e0"), y2)                           # (K*N0, 16)
    wd2 = piece("wd2")                                      # (K*16, 3)
    o_ref[0] = _tree_sum([dot(t3[k * N0:(k + 1) * N0, :], wd2[k * 16:(k + 1) * 16, :])
                          for k in range(K)])               # (N0, 3)


# ------------------- host-side (ONE-TIME) operator / weight packing ---------------- #

def _cheb_basis(L, K):
    """Stack of Chebyshev polynomials [I; L; 2L^2 - I; ...] of the fixed operator L."""
    mats = [jnp.eye(L.shape[0], dtype=jnp.float32)]
    if K > 1:
        mats.append(L)
    for _ in range(2, K):
        mats.append(2.0 * (L @ mats[-1]) - mats[-2])
    return jnp.concatenate(mats, axis=0)                    # (K*N, N)


def build_slab(params, L_list, down_mats, up_mats, K, filters, z_dim):
    """Fold pools/upsamples into the Chebyshev operator stacks, pre-transpose the linear
    weights, merge all biases into one block, and pack everything into a single
    (rows, 128) f32 slab.  Returns (slab, layout) with layout = {name: (row, nrows, ncols)}.
    This runs ONCE at model-load time (never per forward call)."""
    D0, D1 = down_mats
    U0, U1 = up_mats
    f_last = filters[-1]

    pieces = {}
    pieces["big_e0"] = _cheb_basis(L_list[0], K[0])                      # also final conv
    pieces["wc0"] = params["cheb"][0]["W"].reshape(-1, filters[1])       # (K*3, 16)
    pieces["big_e1"] = _cheb_basis(L_list[1], K[1]) @ D0                 # (K*N1, N0)
    pieces["wc1"] = params["cheb"][1]["W"].reshape(-1, filters[2])       # (K*16, 32)
    pieces["d1"] = D1                                                    # (NZ, N1)
    pieces["wencT"] = params["enc_lin"]["W"].T                           # (NZ*32, z)
    pieces["wdecT"] = params["dec_lin"]["W"].T                           # (z, NZ*32)
    pieces["big_d0"] = _cheb_basis(L_list[1], K[0]) @ U1                 # (K*N1, NZ)
    pieces["wd0"] = params["cheb_dec"][0]["W"].reshape(-1, f_last)       # (K*32, 32)
    pieces["big_d1"] = _cheb_basis(L_list[0], K[1]) @ U0                 # (K*N0, N1)
    pieces["wd1"] = params["cheb_dec"][1]["W"].reshape(-1, filters[1])   # (K*32, 16)
    pieces["wd2"] = params["cheb_dec"][2]["W"].reshape(-1, filters[0])   # (K*16, 3)

    bias = jnp.zeros((6, LANES), jnp.float32)
    bias = bias.at[0, :filters[1]].set(params["cheb"][0]["b"])
    bias = bias.at[1, :filters[2]].set(params["cheb"][1]["b"])
    bias = bias.at[2, :z_dim].set(params["enc_lin"]["b"])
    bias = bias.at[3, :].set(params["dec_lin"]["b"])
    bias = bias.at[4, :f_last].set(params["cheb_dec"][0]["b"])
    bias = bias.at[5, :filters[1]].set(params["cheb_dec"][1]["b"])
    pieces["bias"] = bias

    layout = {}
    blocks = []
    row = 0
    for name, arr in pieces.items():
        arr = jnp.asarray(arr, jnp.float32)
        nr, nc = arr.shape
        pr = -(-nr // 8) * 8                                 # pad rows to multiple of 8
        blk = jnp.zeros((pr, LANES), jnp.float32).at[:nr, :nc].set(arr)
        layout[name] = (row, nr, nc)
        blocks.append(blk)
        row += pr
    return jnp.concatenate(blocks, axis=0), layout           # (~600, 128) ~= 300 KiB


def forward_fused(x, slab, layout, *, N0, N1, NZ, K, num_features):
    """GraphAutoencoder forward: one pallas_call, grid over the batch ('parallel'),
    weight slab resident across grid steps."""
    B = x.shape[0]
    x = x.reshape(B, N0, num_features).astype(jnp.float32)
    kernel = functools.partial(_gae_kernel, layout=layout, N0=N0, N1=N1, NZ=NZ, K=K)
    return pl.pallas_call(
        kernel,
        out_shape=jax.ShapeDtypeStruct((B, N0, num_features), jnp.float32),
        grid=(B,),
        in_specs=[
            pl.BlockSpec(slab.shape, lambda b: (0, 0)),              # resident weights
            pl.BlockSpec((1, N0, num_features), lambda b: (b, 0, 0)),
        ],
        out_specs=pl.BlockSpec((1, N0, num_features), lambda b: (b, 0, 0)),
        compiler_params=pltpu.CompilerParams(dimension_semantics=("parallel",)),
    )(slab, x)


# ------------------------- model setup (plain JAX glue) --------------------------- #

def ring_adjacency(n):
    idx = jnp.arange(n)
    A = jnp.zeros((n, n), jnp.float32)
    A = A.at[idx, (idx + 1) % n].set(1.0)
    A = A.at[idx, (idx - 1) % n].set(1.0)
    return A


def sym_norm(A):
    # ChebConv_Coma.norm: remove self loops, D^-1/2 A D^-1/2 (inf -> 0)
    A = A * (1.0 - jnp.eye(A.shape[0], dtype=A.dtype))
    deg = jnp.sum(A, axis=1)
    dis = jnp.where(deg > 0, 1.0 / jnp.sqrt(deg), 0.0)
    return dis[:, None] * A * dis[None, :]


def selection_matrix(m, n):
    stride = n // m
    M = jnp.zeros((m, n), jnp.float32)
    return M.at[jnp.arange(m), jnp.arange(m) * stride].set(1.0)


def expansion_matrix(m, n):
    M = jnp.zeros((m, n), jnp.float32)
    return M.at[jnp.arange(m), jnp.arange(m) // (m // n)].set(1.0)


def init_params(key, filters, K, z, n_feat_before_z, dec_out_dim):
    ks = iter(jax.random.split(key, 32))
    nrm = lambda k, shape: 0.1 * jax.random.normal(k, shape, jnp.float32)
    params = {}
    params["cheb"] = []
    for i in range(len(filters) - 2):
        params["cheb"].append({
            "W": nrm(next(ks), (K[i], filters[i], filters[i + 1])),
            "b": nrm(next(ks), (filters[i + 1],)),
        })
    params["cheb_dec"] = []
    for i in range(len(filters) - 1):
        p = {"W": nrm(next(ks), (K[i], filters[-i - 1], filters[-i - 2]))}
        p["b"] = nrm(next(ks), (filters[-i - 2],))
        params["cheb_dec"].append(p)
    params["cheb_dec"][-1]["b"] = None                       # cheb_dec[-1].bias = None
    params["enc_lin"] = {"W": nrm(next(ks), (z, n_feat_before_z)),
                         "b": nrm(next(ks), (z,))}
    params["dec_lin"] = {"W": nrm(next(ks), (dec_out_dim, z)),
                         "b": nrm(next(ks), (dec_out_dim,))}
    return params


# ------------------------------ pure-JAX reference -------------------------------- #

def _ref_cheb(x, L, W, b, relu):
    K = W.shape[0]
    out = jnp.einsum("bnf,fg->bng", x, W[0])
    if K > 1:
        tx0, tx1 = x, jnp.einsum("mn,bnf->bmf", L, x)
        out += jnp.einsum("bnf,fg->bng", tx1, W[1])
        for k in range(2, K):
            tx2 = 2.0 * jnp.einsum("mn,bnf->bmf", L, tx1) - tx0
            out += jnp.einsum("bnf,fg->bng", tx2, W[k])
            tx0, tx1 = tx1, tx2
    if b is not None:
        out = out + b
    return jnp.maximum(out, 0.0) if relu else out


def forward_ref(x, params, L_list, down_mats, up_mats, filters, n_layers):
    B = x.shape[0]
    x = x.reshape(B, -1, filters[0])
    for i in range(n_layers):
        x = _ref_cheb(x, L_list[i], params["cheb"][i]["W"], params["cheb"][i]["b"], True)
        x = jnp.einsum("mn,bnf->bmf", down_mats[i], x)
    x = x.reshape(B, -1)
    z = x @ params["enc_lin"]["W"].T + params["enc_lin"]["b"]
    x = jnp.maximum(z @ params["dec_lin"]["W"].T + params["dec_lin"]["b"], 0.0)
    x = x.reshape(B, -1, filters[-1])
    for i in range(n_layers):
        x = jnp.einsum("mn,bnf->bmf", up_mats[-i - 1], x)
        x = _ref_cheb(x, L_list[n_layers - i - 1],
                      params["cheb_dec"][i]["W"], params["cheb_dec"][i]["b"], True)
    return _ref_cheb(x, L_list[-1], params["cheb_dec"][-1]["W"], None, False)


# ---------------------------------------- main ------------------------------------ #

if __name__ == "__main__":
    n_layers = 2
    num_features = 3
    filters = [num_features, 16, 32, 32]
    K = [3, 3, 3]
    z_dim = 8
    B = 2
    N0, N1, N2 = 16, 8, 4          # pooling levels: 16 -> 8 -> 4 nodes

    L0 = sym_norm(ring_adjacency(N0))
    L1 = sym_norm(ring_adjacency(N1))
    L_list = [L0, L1, L0]

    down_mats = [selection_matrix(N1, N0), selection_matrix(N2, N1)]
    up_mats = [expansion_matrix(N0, N1), expansion_matrix(N1, N2)]

    n_feat_before_z = down_mats[-1].shape[0] * filters[-1]   # 4 * 32 = 128
    dec_out_dim = filters[-1] * up_mats[-1].shape[1]         # 32 * 4 = 128

    key = jax.random.PRNGKey(0)
    k_params, k_x = jax.random.split(key)
    params = init_params(k_params, filters, K, z_dim, n_feat_before_z, dec_out_dim)

    x = jax.random.normal(k_x, (B, N0, num_features), jnp.float32)

    # One-time preprocessing (cache this at model-load time), then one fused kernel call.
    slab, layout = build_slab(params, L_list, down_mats, up_mats, K, filters, z_dim)
    slab = jax.block_until_ready(slab)

    out = forward_fused(x, slab, layout, N0=N0, N1=N1, NZ=N2, K=K[0],
                        num_features=num_features)
    out = jax.block_until_ready(out)
    assert out.shape == (B, N0, num_features), out.shape

    ref = forward_ref(x, params, L_list, down_mats, up_mats, filters, n_layers)
    assert jnp.allclose(out, ref, atol=1e-3, rtol=1e-3), float(jnp.max(jnp.abs(out - ref)))

    print("KERNEL_OK")
</pallas_src>

<mosaic_0001>
module attributes {stable_mosaic.version = 11 : i64} {
  func.func @_gae_kernel(%arg0: i32, %arg1: memref<600x128xf32, #tpu.memory_space<vmem>>, %arg2: memref<1x16x3xf32, #tpu.memory_space<vmem>>, %arg3: memref<1x16x3xf32, #tpu.memory_space<vmem>>) attributes {dimension_semantics = [#tpu.dimension_semantics<parallel>], iteration_bounds = array<i64: 2>, scalar_prefetch = 0 : i64, scratch_operands = 0 : i64, tpu.core_type = #tpu.core_type<tc>, window_params = [{pipeline_mode = #tpu.pipeline_mode<synchronous>, transform_indices = @transform_0, window_bounds = array<i64: 600, 128>}, {transform_indices = @transform_1, window_bounds = array<i64: 1, 16, 3>}, {transform_indices = @transform_2, window_bounds = array<i64: 1, 16, 3>}]} {
    %c592 = arith.constant 592 : index
    %c0 = arith.constant 0 : index
    %0 = vector.load %arg1[%c592, %c0] : memref<600x128xf32, #tpu.memory_space<vmem>>, vector<6x128xf32>
    %c0_0 = arith.constant 0 : index
    %c0_1 = arith.constant 0 : index
    %c0_2 = arith.constant 0 : index
    %1 = vector.load %arg2[%c0_0, %c0_1, %c0_2] : memref<1x16x3xf32, #tpu.memory_space<vmem>>, vector<1x16x3xf32>
    %2 = vector.shape_cast %1 : vector<1x16x3xf32> to vector<16x3xf32>
    %c0_3 = arith.constant 0 : index
    %c0_4 = arith.constant 0 : index
    %3 = vector.load %arg1[%c0_3, %c0_4] : memref<600x128xf32, #tpu.memory_space<vmem>>, vector<48x16xf32>
    %cst = arith.constant dense<0.000000e+00> : vector<48x3xf32>
    %4 = tpu.matmul %3, %2, %cst {dimension_numbers = #tpu.dot_dimension_numbers<[1], [0], [0], [1], [0, 0, 1, 1], [], []>} : vector<48x16xf32>, vector<16x3xf32>, vector<48x3xf32> -> vector<48x3xf32>
    %c48 = arith.constant 48 : index
    %c0_5 = arith.constant 0 : index
    %5 = vector.load %arg1[%c48, %c0_5] : memref<600x128xf32, #tpu.memory_space<vmem>>, vector<9x16xf32>
    %6 = vector.extract_strided_slice %4 {offsets = [0, 0], sizes = [16, 3], strides = [1, 1]} : vector<48x3xf32> to vector<16x3xf32>
    %7 = vector.extract_strided_slice %6 {offsets = [0, 0], sizes = [16, 1], strides = [1, 1]} : vector<16x3xf32> to vector<16x1xf32>
    %8 = vector.extract_strided_slice %5 {offsets = [0, 0], sizes = [1, 16], strides = [1, 1]} : vector<9x16xf32> to vector<1x16xf32>
    %9 = vector.broadcast %7 : vector<16x1xf32> to vector<16x16xf32>
    %10 = vector.broadcast %8 : vector<1x16xf32> to vector<16x16xf32>
    %11 = arith.mulf %9, %10 : vector<16x16xf32>
    %12 = vector.extract_strided_slice %6 {offsets = [0, 1], sizes = [16, 1], strides = [1, 1]} : vector<16x3xf32> to vector<16x1xf32>
    %13 = vector.extract_strided_slice %5 {offsets = [1, 0], sizes = [1, 16], strides = [1, 1]} : vector<9x16xf32> to vector<1x16xf32>
    %14 = vector.broadcast %12 : vector<16x1xf32> to vector<16x16xf32>
    %15 = vector.broadcast %13 : vector<1x16xf32> to vector<16x16xf32>
    %16 = arith.mulf %14, %15 : vector<16x16xf32>
    %17 = vector.extract_strided_slice %6 {offsets = [0, 2], sizes = [16, 1], strides = [1, 1]} : vector<16x3xf32> to vector<16x1xf32>
    %18 = vector.extract_strided_slice %5 {offsets = [2, 0], sizes = [1, 16], strides = [1, 1]} : vector<9x16xf32> to vector<1x16xf32>
    %19 = vector.broadcast %17 : vector<16x1xf32> to vector<16x16xf32>
    %20 = vector.broadcast %18 : vector<1x16xf32> to vector<16x16xf32>
    %21 = arith.mulf %19, %20 : vector<16x16xf32>
    %22 = vector.extract_strided_slice %4 {offsets = [16, 0], sizes = [16, 3], strides = [1, 1]} : vector<48x3xf32> to vector<16x3xf32>
    %23 = vector.extract_strided_slice %22 {offsets = [0, 0], sizes = [16, 1], strides = [1, 1]} : vector<16x3xf32> to vector<16x1xf32>
    %24 = vector.extract_strided_slice %5 {offsets = [3, 0], sizes = [1, 16], strides = [1, 1]} : vector<9x16xf32> to vector<1x16xf32>
    %25 = vector.broadcast %23 : vector<16x1xf32> to vector<16x16xf32>
    %26 = vector.broadcast %24 : vector<1x16xf32> to vector<16x16xf32>
    %27 = arith.mulf %25, %26 : vector<16x16xf32>
    %28 = vector.extract_strided_slice %22 {offsets = [0, 1], sizes = [16, 1], strides = [1, 1]} : vector<16x3xf32> to vector<16x1xf32>
    %29 = vector.extract_strided_slice %5 {offsets = [4, 0], sizes = [1, 16], strides = [1, 1]} : vector<9x16xf32> to vector<1x16xf32>
    %30 = vector.broadcast %28 : vector<16x1xf32> to vector<16x16xf32>
    %31 = vector.broadcast %29 : vector<1x16xf32> to vector<16x16xf32>
    %32 = arith.mulf %30, %31 : vector<16x16xf32>
    %33 = vector.extract_strided_slice %22 {offsets = [0, 2], sizes = [16, 1], strides = [1, 1]} : vector<16x3xf32> to vector<16x1xf32>
    %34 = vector.extract_strided_slice %5 {offsets = [5, 0], sizes = [1, 16], strides = [1, 1]} : vector<9x16xf32> to vector<1x16xf32>
    %35 = vector.broadcast %33 : vector<16x1xf32> to vector<16x16xf32>
    %36 = vector.broadcast %34 : vector<1x16xf32> to vector<16x16xf32>
    %37 = arith.mulf %35, %36 : vector<16x16xf32>
    %38 = vector.extract_strided_slice %4 {offsets = [32, 0], sizes = [16, 3], strides = [1, 1]} : vector<48x3xf32> to vector<16x3xf32>
    %39 = vector.extract_strided_slice %38 {offsets = [0, 0], sizes = [16, 1], strides = [1, 1]} : vector<16x3xf32> to vector<16x1xf32>
    %40 = vector.extract_strided_slice %5 {offsets = [6, 0], sizes = [1, 16], strides = [1, 1]} : vector<9x16xf32> to vector<1x16xf32>
    %41 = vector.broadcast %39 : vector<16x1xf32> to vector<16x16xf32>
    %42 = vector.broadcast %40 : vector<1x16xf32> to vector<16x16xf32>
    %43 = arith.mulf %41, %42 : vector<16x16xf32>
    %44 = vector.extract_strided_slice %38 {offsets = [0, 1], sizes = [16, 1], strides = [1, 1]} : vector<16x3xf32> to vector<16x1xf32>
    %45 = vector.extract_strided_slice %5 {offsets = [7, 0], sizes = [1, 16], strides = [1, 1]} : vector<9x16xf32> to vector<1x16xf32>
    %46 = vector.broadcast %44 : vector<16x1xf32> to vector<16x16xf32>
    %47 = vector.broadcast %45 : vector<1x16xf32> to vector<16x16xf32>
    %48 = arith.mulf %46, %47 : vector<16x16xf32>
    %49 = vector.extract_strided_slice %38 {offsets = [0, 2], sizes = [16, 1], strides = [1, 1]} : vector<16x3xf32> to vector<16x1xf32>
    %50 = vector.extract_strided_slice %5 {offsets = [8, 0], sizes = [1, 16], strides = [1, 1]} : vector<9x16xf32> to vector<1x16xf32>
    %51 = vector.broadcast %49 : vector<16x1xf32> to vector<16x16xf32>
    %52 = vector.broadcast %50 : vector<1x16xf32> to vector<16x16xf32>
    %53 = arith.mulf %51, %52 : vector<16x16xf32>
    %54 = arith.addf %11, %16 : vector<16x16xf32>
    %55 = arith.addf %21, %27 : vector<16x16xf32>
    %56 = arith.addf %32, %37 : vector<16x16xf32>
    %57 = arith.addf %43, %48 : vector<16x16xf32>
    %58 = arith.addf %54, %55 : vector<16x16xf32>
    %59 = arith.addf %56, %57 : vector<16x16xf32>
    %60 = arith.addf %58, %59 : vector<16x16xf32>
    %61 = arith.addf %60, %53 : vector<16x16xf32>
    %62 = vector.extract_strided_slice %0 {offsets = [0, 0], sizes = [1, 16], strides = [1, 1]} : vector<6x128xf32> to vector<1x16xf32>
    %63 = vector.broadcast %62 : vector<1x16xf32> to vector<16x16xf32>
    %64 = arith.addf %61, %63 : vector<16x16xf32>
    %cst_6 = arith.constant 0.000000e+00 : f32
    %65 = vector.broadcast %cst_6 : f32 to vector<16x16xf32>
    %66 = arith.maximumf %64, %65 : vector<16x16xf32>
    %c64 = arith.constant 64 : index
    %c0_7 = arith.constant 0 : index
    %67 = vector.load %arg1[%c64, %c0_7] : memref<600x128xf32, #tpu.memory_space<vmem>>, vector<24x16xf32>
    %cst_8 = arith.constant dense<0.000000e+00> : vector<24x16xf32>
    %68 = tpu.matmul %67, %66, %cst_8 {dimension_numbers = #tpu.dot_dimension_numbers<[1], [0], [0], [1], [0, 0, 1, 1], [], []>} : vector<24x16xf32>, vector<16x16xf32>, vector<24x16xf32> -> vector<24x16xf32>
    %c88 = arith.constant 88 : index
    %c0_9 = arith.constant 0 : index
    %69 = vector.load %arg1[%c88, %c0_9] : memref<600x128xf32, #tpu.memory_space<vmem>>, vector<48x32xf32>
    %70 = vector.extract_strided_slice %68 {offsets = [0, 0], sizes = [8, 16], strides = [1, 1]} : vector<24x16xf32> to vector<8x16xf32>
    %71 = vector.extract_strided_slice %69 {offsets = [0, 0], sizes = [16, 32], strides = [1, 1]} : vector<48x32xf32> to vector<16x32xf32>
    %cst_10 = arith.constant dense<0.000000e+00> : vector<8x32xf32>
    %72 = tpu.matmul %70, %71, %cst_10 {dimension_numbers = #tpu.dot_dimension_numbers<[1], [0], [0], [1], [0, 0, 1, 1], [], []>} : vector<8x16xf32>, vector<16x32xf32>, vector<8x32xf32> -> vector<8x32xf32>
    %73 = vector.extract_strided_slice %68 {offsets = [8, 0], sizes = [8, 16], strides = [1, 1]} : vector<24x16xf32> to vector<8x16xf32>
    %74 = vector.extract_strided_slice %69 {offsets = [16, 0], sizes = [16, 32], strides = [1, 1]} : vector<48x32xf32> to vector<16x32xf32>
    %cst_11 = arith.constant dense<0.000000e+00> : vector<8x32xf32>
    %75 = tpu.matmul %73, %74, %cst_11 {dimension_numbers = #tpu.dot_dimension_numbers<[1], [0], [0], [1], [0, 0, 1, 1], [], []>} : vector<8x16xf32>, vector<16x32xf32>, vector<8x32xf32> -> vector<8x32xf32>
    %76 = vector.extract_strided_slice %68 {offsets = [16, 0], sizes = [8, 16], strides = [1, 1]} : vector<24x16xf32> to vector<8x16xf32>
    %77 = vector.extract_strided_slice %69 {offsets = [32, 0], sizes = [16, 32], strides = [1, 1]} : vector<48x32xf32> to vector<16x32xf32>
    %cst_12 = arith.constant dense<0.000000e+00> : vector<8x32xf32>
    %78 = tpu.matmul %76, %77, %cst_12 {dimension_numbers = #tpu.dot_dimension_numbers<[1], [0], [0], [1], [0, 0, 1, 1], [], []>} : vector<8x16xf32>, vector<16x32xf32>, vector<8x32xf32> -> vector<8x32xf32>
    %79 = arith.addf %72, %75 : vector<8x32xf32>
    %80 = arith.addf %79, %78 : vector<8x32xf32>
    %81 = vector.extract_strided_slice %0 {offsets = [1, 0], sizes = [1, 32], strides = [1, 1]} : vector<6x128xf32> to vector<1x32xf32>
    %82 = vector.broadcast %81 : vector<1x32xf32> to vector<8x32xf32>
    %83 = arith.addf %80, %82 : vector<8x32xf32>
    %cst_13 = arith.constant 0.000000e+00 : f32
    %84 = vector.broadcast %cst_13 : f32 to vector<8x32xf32>
    %85 = arith.maximumf %83, %84 : vector<8x32xf32>
    %c136 = arith.constant 136 : index
    %c0_14 = arith.constant 0 : index
    %86 = vector.load %arg1[%c136, %c0_14] : memref<600x128xf32, #tpu.memory_space<vmem>>, vector<4x8xf32>
    %cst_15 = arith.constant dense<0.000000e+00> : vector<4x32xf32>
    %87 = tpu.matmul %86, %85, %cst_15 {dimension_numbers = #tpu.dot_dimension_numbers<[1], [0], [0], [1], [0, 0, 1, 1], [], []>} : vector<4x8xf32>, vector<8x32xf32>, vector<4x32xf32> -> vector<4x32xf32>
    %c144 = arith.constant 144 : index
    %c0_16 = arith.constant 0 : index
    %88 = vector.load %arg1[%c144, %c0_16] : memref<600x128xf32, #tpu.memory_space<vmem>>, vector<128x8xf32>
    %89 = vector.extract_strided_slice %87 {offsets = [0, 0], sizes = [1, 32], strides = [1, 1]} : vector<4x32xf32> to vector<1x32xf32>
    %90 = vector.extract_strided_slice %88 {offsets = [0, 0], sizes = [32, 8], strides = [1, 1]} : vector<128x8xf32> to vector<32x8xf32>
    %cst_17 = arith.constant dense<0.000000e+00> : vector<1x8xf32>
    %91 = tpu.matmul %89, %90, %cst_17 {dimension_numbers = #tpu.dot_dimension_numbers<[1], [0], [0], [1], [0, 0, 1, 1], [], []>} : vector<1x32xf32>, vector<32x8xf32>, vector<1x8xf32> -> vector<1x8xf32>
    %92 = vector.extract_strided_slice %87 {offsets = [1, 0], sizes = [1, 32], strides = [1, 1]} : vector<4x32xf32> to vector<1x32xf32>
    %93 = vector.extract_strided_slice %88 {offsets = [32, 0], sizes = [32, 8], strides = [1, 1]} : vector<128x8xf32> to vector<32x8xf32>
    %cst_18 = arith.constant dense<0.000000e+00> : vector<1x8xf32>
    %94 = tpu.matmul %92, %93, %cst_18 {dimension_numbers = #tpu.dot_dimension_numbers<[1], [0], [0], [1], [0, 0, 1, 1], [], []>} : vector<1x32xf32>, vector<32x8xf32>, vector<1x8xf32> -> vector<1x8xf32>
    %95 = vector.extract_strided_slice %87 {offsets = [2, 0], sizes = [1, 32], strides = [1, 1]} : vector<4x32xf32> to vector<1x32xf32>
    %96 = vector.extract_strided_slice %88 {offsets = [64, 0], sizes = [32, 8], strides = [1, 1]} : vector<128x8xf32> to vector<32x8xf32>
    %cst_19 = arith.constant dense<0.000000e+00> : vector<1x8xf32>
    %97 = tpu.matmul %95, %96, %cst_19 {dimension_numbers = #tpu.dot_dimension_numbers<[1], [0], [0], [1], [0, 0, 1, 1], [], []>} : vector<1x32xf32>, vector<32x8xf32>, vector<1x8xf32> -> vector<1x8xf32>
    %98 = vector.extract_strided_slice %87 {offsets = [3, 0], sizes = [1, 32], strides = [1, 1]} : vector<4x32xf32> to vector<1x32xf32>
    %99 = vector.extract_strided_slice %88 {offsets = [96, 0], sizes = [32, 8], strides = [1, 1]} : vector<128x8xf32> to vector<32x8xf32>
    %cst_20 = arith.constant dense<0.000000e+00> : vector<1x8xf32>
    %100 = tpu.matmul %98, %99, %cst_20 {dimension_numbers = #tpu.dot_dimension_numbers<[1], [0], [0], [1], [0, 0, 1, 1], [], []>} : vector<1x32xf32>, vector<32x8xf32>, vector<1x8xf32> -> vector<1x8xf32>
    %101 = arith.addf %91, %94 : vector<1x8xf32>
    %102 = arith.addf %97, %100 : vector<1x8xf32>
    %103 = arith.addf %101, %102 : vector<1x8xf32>
    %104 = vector.extract_strided_slice %0 {offsets = [2, 0], sizes = [1, 8], strides = [1, 1]} : vector<6x128xf32> to vector<1x8xf32>
    %105 = arith.addf %103, %104 : vector<1x8xf32>
    %c272 = arith.constant 272 : index
    %c0_21 = arith.constant 0 : index
    %106 = vector.load %arg1[%c272, %c0_21] : memref<600x128xf32, #tpu.memory_space<vmem>>, vector<8x128xf32>
    %cst_22 = arith.constant dense<0.000000e+00> : vector<1x128xf32>
    %107 = tpu.matmul %105, %106, %cst_22 {dimension_numbers = #tpu.dot_dimension_numbers<[1], [0], [0], [1], [0, 0, 1, 1], [], []>} : vector<1x8xf32>, vector<8x128xf32>, vector<1x128xf32> -> vector<1x128xf32>
    %108 = vector.extract_strided_slice %0 {offsets = [3, 0], sizes = [1, 128], strides = [1, 1]} : vector<6x128xf32> to vector<1x128xf32>
    %109 = arith.addf %107, %108 : vector<1x128xf32>
    %cst_23 = arith.constant 0.000000e+00 : f32
    %110 = vector.broadcast %cst_23 : f32 to vector<1x128xf32>
    %111 = arith.maximumf %109, %110 : vector<1x128xf32>
    %c280 = arith.constant 280 : index
    %c0_24 = arith.constant 0 : index
    %112 = vector.load %arg1[%c280, %c0_24] : memref<600x128xf32, #tpu.memory_space<vmem>>, vector<24x4xf32>
    %113 = vector.extract_strided_slice %112 {offsets = [0, 0], sizes = [24, 1], strides = [1, 1]} : vector<24x4xf32> to vector<24x1xf32>
    %114 = vector.extract_strided_slice %111 {offsets = [0, 0], sizes = [1, 32], strides = [1, 1]} : vector<1x128xf32> to vector<1x32xf32>
    %115 = vector.broadcast %113 : vector<24x1xf32> to vector<24x32xf32>
    %116 = vector.broadcast %114 : vector<1x32xf32> to vector<24x32xf32>
    %117 = arith.mulf %115, %116 : vector<24x32xf32>
    %118 = vector.extract_strided_slice %112 {offsets = [0, 1], sizes = [24, 1], strides = [1, 1]} : vector<24x4xf32> to vector<24x1xf32>
    %119 = vector.extract_strided_slice %111 {offsets = [0, 32], sizes = [1, 32], strides = [1, 1]} : vector<1x128xf32> to vector<1x32xf32>
    %120 = vector.broadcast %118 : vector<24x1xf32> to vector<24x32xf32>
    %121 = vector.broadcast %119 : vector<1x32xf32> to vector<24x32xf32>
    %122 = arith.mulf %120, %121 : vector<24x32xf32>
    %123 = vector.extract_strided_slice %112 {offsets = [0, 2], sizes = [24, 1], strides = [1, 1]} : vector<24x4xf32> to vector<24x1xf32>
    %124 = vector.extract_strided_slice %111 {offsets = [0, 64], sizes = [1, 32], strides = [1, 1]} : vector<1x128xf32> to vector<1x32xf32>
    %125 = vector.broadcast %123 : vector<24x1xf32> to vector<24x32xf32>
    %126 = vector.broadcast %124 : vector<1x32xf32> to vector<24x32xf32>
    %127 = arith.mulf %125, %126 : vector<24x32xf32>
    %128 = vector.extract_strided_slice %112 {offsets = [0, 3], sizes = [24, 1], strides = [1, 1]} : vector<24x4xf32> to vector<24x1xf32>
    %129 = vector.extract_strided_slice %111 {offsets = [0, 96], sizes = [1, 32], strides = [1, 1]} : vector<1x128xf32> to vector<1x32xf32>
    %130 = vector.broadcast %128 : vector<24x1xf32> to vector<24x32xf32>
    %131 = vector.broadcast %129 : vector<1x32xf32> to vector<24x32xf32>
    %132 = arith.mulf %130, %131 : vector<24x32xf32>
    %133 = arith.addf %117, %122 : vector<24x32xf32>
    %134 = arith.addf %127, %132 : vector<24x32xf32>
    %135 = arith.addf %133, %134 : vector<24x32xf32>
    %c304 = arith.constant 304 : index
    %c0_25 = arith.constant 0 : index
    %136 = vector.load %arg1[%c304, %c0_25] : memref<600x128xf32, #tpu.memory_space<vmem>>, vector<96x32xf32>
    %137 = vector.extract_strided_slice %135 {offsets = [0, 0], sizes = [8, 32], strides = [1, 1]} : vector<24x32xf32> to vector<8x32xf32>
    %138 = vector.extract_strided_slice %136 {offsets = [0, 0], sizes = [32, 32], strides = [1, 1]} : vector<96x32xf32> to vector<32x32xf32>
    %cst_26 = arith.constant dense<0.000000e+00> : vector<8x32xf32>
    %139 = tpu.matmul %137, %138, %cst_26 {dimension_numbers = #tpu.dot_dimension_numbers<[1], [0], [0], [1], [0, 0, 1, 1], [], []>} : vector<8x32xf32>, vector<32x32xf32>, vector<8x32xf32> -> vector<8x32xf32>
    %140 = vector.extract_strided_slice %135 {offsets = [8, 0], sizes = [8, 32], strides = [1, 1]} : vector<24x32xf32> to vector<8x32xf32>
    %141 = vector.extract_strided_slice %136 {offsets = [32, 0], sizes = [32, 32], strides = [1, 1]} : vector<96x32xf32> to vector<32x32xf32>
    %cst_27 = arith.constant dense<0.000000e+00> : vector<8x32xf32>
    %142 = tpu.matmul %140, %141, %cst_27 {dimension_numbers = #tpu.dot_dimension_numbers<[1], [0], [0], [1], [0, 0, 1, 1], [], []>} : vector<8x32xf32>, vector<32x32xf32>, vector<8x32xf32> -> vector<8x32xf32>
    %143 = vector.extract_strided_slice %135 {offsets = [16, 0], sizes = [8, 32], strides = [1, 1]} : vector<24x32xf32> to vector<8x32xf32>
    %144 = vector.extract_strided_slice %136 {offsets = [64, 0], sizes = [32, 32], strides = [1, 1]} : vector<96x32xf32> to vector<32x32xf32>
    %cst_28 = arith.constant dense<0.000000e+00> : vector<8x32xf32>
    %145 = tpu.matmul %143, %144, %cst_28 {dimension_numbers = #tpu.dot_dimension_numbers<[1], [0], [0], [1], [0, 0, 1, 1], [], []>} : vector<8x32xf32>, vector<32x32xf32>, vector<8x32xf32> -> vector<8x32xf32>
    %146 = arith.addf %139, %142 : vector<8x32xf32>
    %147 = arith.addf %146, %145 : vector<8x32xf32>
    %148 = vector.extract_strided_slice %0 {offsets = [4, 0], sizes = [1, 32], strides = [1, 1]} : vector<6x128xf32> to vector<1x32xf32>
    %149 = vector.broadcast %148 : vector<1x32xf32> to vector<8x32xf32>
    %150 = arith.addf %147, %149 : vector<8x32xf32>
    %cst_29 = arith.constant 0.000000e+00 : f32
    %151 = vector.broadcast %cst_29 : f32 to vector<8x32xf32>
    %152 = arith.maximumf %150, %151 : vector<8x32xf32>
    %c400 = arith.constant 400 : index
    %c0_30 = arith.constant 0 : index
    %153 = vector.load %arg1[%c400, %c0_30] : memref<600x128xf32, #tpu.memory_space<vmem>>, vector<48x8xf32>
    %cst_31 = arith.constant dense<0.000000e+00> : vector<48x32xf32>
    %154 = tpu.matmul %153, %152, %cst_31 {dimension_numbers = #tpu.dot_dimension_numbers<[1], [0], [0], [1], [0, 0, 1, 1], [], []>} : vector<48x8xf32>, vector<8x32xf32>, vector<48x32xf32> -> vector<48x32xf32>
    %c448 = arith.constant 448 : index
    %c0_32 = arith.constant 0 : index
    %155 = vector.load %arg1[%c448, %c0_32] : memref<600x128xf32, #tpu.memory_space<vmem>>, vector<96x16xf32>
    %156 = vector.extract_strided_slice %154 {offsets = [0, 0], sizes = [16, 32], strides = [1, 1]} : vector<48x32xf32> to vector<16x32xf32>
    %157 = vector.extract_strided_slice %155 {offsets = [0, 0], sizes = [32, 16], strides = [1, 1]} : vector<96x16xf32> to vector<32x16xf32>
    %cst_33 = arith.constant dense<0.000000e+00> : vector<16x16xf32>
    %158 = tpu.matmul %156, %157, %cst_33 {dimension_numbers = #tpu.dot_dimension_numbers<[1], [0], [0], [1], [0, 0, 1, 1], [], []>} : vector<16x32xf32>, vector<32x16xf32>, vector<16x16xf32> -> vector<16x16xf32>
    %159 = vector.extract_strided_slice %154 {offsets = [16, 0], sizes = [16, 32], strides = [1, 1]} : vector<48x32xf32> to vector<16x32xf32>
    %160 = vector.extract_strided_slice %155 {offsets = [32, 0], sizes = [32, 16], strides = [1, 1]} : vector<96x16xf32> to vector<32x16xf32>
    %cst_34 = arith.constant dense<0.000000e+00> : vector<16x16xf32>
    %161 = tpu.matmul %159, %160, %cst_34 {dimension_numbers = #tpu.dot_dimension_numbers<[1], [0], [0], [1], [0, 0, 1, 1], [], []>} : vector<16x32xf32>, vector<32x16xf32>, vector<16x16xf32> -> vector<16x16xf32>
    %162 = vector.extract_strided_slice %154 {offsets = [32, 0], sizes = [16, 32], strides = [1, 1]} : vector<48x32xf32> to vector<16x32xf32>
    %163 = vector.extract_strided_slice %155 {offsets = [64, 0], sizes = [32, 16], strides = [1, 1]} : vector<96x16xf32> to vector<32x16xf32>
    %cst_35 = arith.constant dense<0.000000e+00> : vector<16x16xf32>
    %164 = tpu.matmul %162, %163, %cst_35 {dimension_numbers = #tpu.dot_dimension_numbers<[1], [0], [0], [1], [0, 0, 1, 1], [], []>} : vector<16x32xf32>, vector<32x16xf32>, vector<16x16xf32> -> vector<16x16xf32>
    %165 = arith.addf %158, %161 : vector<16x16xf32>
    %166 = arith.addf %165, %164 : vector<16x16xf32>
    %167 = vector.extract_strided_slice %0 {offsets = [5, 0], sizes = [1, 16], strides = [1, 1]} : vector<6x128xf32> to vector<1x16xf32>
    %168 = vector.broadcast %167 : vector<1x16xf32> to vector<16x16xf32>
    %169 = arith.addf %166, %168 : vector<16x16xf32>
    %cst_36 = arith.constant 0.000000e+00 : f32
    %170 = vector.broadcast %cst_36 : f32 to vector<16x16xf32>
    %171 = arith.maximumf %169, %170 : vector<16x16xf32>
    %c0_37 = arith.constant 0 : index
    %c0_38 = arith.constant 0 : index
    %172 = vector.load %arg1[%c0_37, %c0_38] : memref<600x128xf32, #tpu.memory_space<vmem>>, vector<48x16xf32>
    %cst_39 = arith.constant dense<0.000000e+00> : vector<48x16xf32>
    %173 = tpu.matmul %172, %171, %cst_39 {dimension_numbers = #tpu.dot_dimension_numbers<[1], [0], [0], [1], [0, 0, 1, 1], [], []>} : vector<48x16xf32>, vector<16x16xf32>, vector<48x16xf32> -> vector<48x16xf32>
    %c544 = arith.constant 544 : index
    %c0_40 = arith.constant 0 : index
    %174 = vector.load %arg1[%c544, %c0_40] : memref<600x128xf32, #tpu.memory_space<vmem>>, vector<48x3xf32>
    %175 = vector.extract_strided_slice %173 {offsets = [0, 0], sizes = [16, 16], strides = [1, 1]} : vector<48x16xf32> to vector<16x16xf32>
    %176 = vector.extract_strided_slice %174 {offsets = [0, 0], sizes = [16, 3], strides = [1, 1]} : vector<48x3xf32> to vector<16x3xf32>
    %cst_41 = arith.constant dense<0.000000e+00> : vector<16x3xf32>
    %177 = tpu.matmul %175, %176, %cst_41 {dimension_numbers = #tpu.dot_dimension_numbers<[1], [0], [0], [1], [0, 0, 1, 1], [], []>} : vector<16x16xf32>, vector<16x3xf32>, vector<16x3xf32> -> vector<16x3xf32>
    %178 = vector.extract_strided_slice %173 {offsets = [16, 0], sizes = [16, 16], strides = [1, 1]} : vector<48x16xf32> to vector<16x16xf32>
    %179 = vector.extract_strided_slice %174 {offsets = [16, 0], sizes = [16, 3], strides = [1, 1]} : vector<48x3xf32> to vector<16x3xf32>
    %cst_42 = arith.constant dense<0.000000e+00> : vector<16x3xf32>
    %180 = tpu.matmul %178, %179, %cst_42 {dimension_numbers = #tpu.dot_dimension_numbers<[1], [0], [0], [1], [0, 0, 1, 1], [], []>} : vector<16x16xf32>, vector<16x3xf32>, vector<16x3xf32> -> vector<16x3xf32>
    %181 = vector.extract_strided_slice %173 {offsets = [32, 0], sizes = [16, 16], strides = [1, 1]} : vector<48x16xf32> to vector<16x16xf32>
    %182 = vector.extract_strided_slice %174 {offsets = [32, 0], sizes = [16, 3], strides = [1, 1]} : vector<48x3xf32> to vector<16x3xf32>
    %cst_43 = arith.constant dense<0.000000e+00> : vector<16x3xf32>
    %183 = tpu.matmul %181, %182, %cst_43 {dimension_numbers = #tpu.dot_dimension_numbers<[1], [0], [0], [1], [0, 0, 1, 1], [], []>} : vector<16x16xf32>, vector<16x3xf32>, vector<16x3xf32> -> vector<16x3xf32>
    %184 = arith.addf %177, %180 : vector<16x3xf32>
    %185 = arith.addf %184, %183 : vector<16x3xf32>
    %c0_44 = arith.constant 0 : index
    %c0_45 = arith.constant 0 : index
    %c0_46 = arith.constant 0 : index
    %186 = vector.load %arg3[%c0_44, %c0_45, %c0_46] : memref<1x16x3xf32, #tpu.memory_space<vmem>>, vector<1x16x3xf32>
    %187 = vector.shape_cast %186 : vector<1x16x3xf32> to vector<16x3xf32>
    %188 = vector.shape_cast %185 : vector<16x3xf32> to vector<1x16x3xf32>
    tpu.vector_store %arg3[%c0_44, %c0_45, %c0_46], %188 {strides = array<i32>} : memref<1x16x3xf32, #tpu.memory_space<vmem>>, vector<1x16x3xf32>,
    return
  }
  func.func @transform_0(%arg0: i32) -> (i32, i32) {
    %c0_i32 = arith.constant 0 : i32
    %c0_i32_0 = arith.constant 0 : i32
    %c0_i32_1 = arith.constant 0 : i32
    return %c0_i32, %c0_i32_0 : i32, i32
  }
  func.func @transform_1(%arg0: i32) -> (i32, i32, i32) {
    %c0_i32 = arith.constant 0 : i32
    %c0_i32_0 = arith.constant 0 : i32
    %c0_i32_1 = arith.constant 0 : i32
    return %arg0, %c0_i32, %c0_i32_0 : i32, i32, i32
  }
  func.func @transform_2(%arg0: i32) -> (i32, i32, i32) {
    %c0_i32 = arith.constant 0 : i32
    %c0_i32_0 = arith.constant 0 : i32
    %c0_i32_1 = arith.constant 0 : i32
    return %arg0, %c0_i32, %c0_i32_0 : i32, i32, i32
  }
}

</mosaic_0001>

<llo_original>
// kernel: tpu_custom_call.1
$region0: #{tpu_custom_call.1}
  #allocation0 [shape = 'u32[]', space=smem, size = 0x4, offset = 0x4, fixed_abs, tag = 'smem constant byte address 0x4 - core index']
  #allocation1 [shape = 'u32[144,128]{1,0:T(1,128)}', space=vmem, size = 0x12000, scoped, tag = 'internal scratch']
  %s0 = inlined_call_operand.hbm [shape: f32[600,128], index: 0, kind: input, shape index: {}]
  %s1 = inlined_call_operand.vmem [shape: f32[2,16,3], index: 1, kind: input, shape index: {}]
  %s2 = inlined_call_operand.vmem [shape: f32[2,16,3], index: 2, kind: output, shape index: {}]
  %s3 = sld [smem:[#allocation0]]
  $region45: #{tpu_custom_call.1} parent=0
    _
  %s5 = ssub.s32 1, %s3
  %s6 = scalar_select 0, %s5, %s3
  $region1: #{tpu_custom_call.1} parent=0
    #allocation2 [shape = 'u8[307200]{0}', space=vmem, size = 0x4b000, scoped, tag = 'input window, operand 0, single buffered']
    #allocation3 [shape = 's32[2]{0}', space=sflag, size = 0x8, scoped, tag = 'scoped memory for tpu_custom_call.1']
    %7 = vsyncpa [#allocation3], 0
    loop: start=0, step=1, limit=4
    $region2: #{tpu_custom_call.1} parent=1 // loop_pre_header
      _
    $region3: #{tpu_custom_call.1} parent=1 // loop_header
      %s9 = sphi 0, %s13
      %p10 = scmp.ge.s32.totalorder %s9, 4
      %s17 = sphi 0, %s17
      %s19 = sphi 0, %s17
      %s20 = sphi 0, %s19
      %s34 = sphi 0, %s20
      %s40 = sphi 0, %s42
      %s43 = sphi 0, %s40
      %s44 = sphi 0, %s43
      %s60 = sphi 0, %s44
      %s66 = sphi 0, %s68
      %s69 = sphi 0, %s66
      %s70 = sphi 0, %s69
      %s86 = sphi 0, %s70
    $region4: #{tpu_custom_call.1} parent=1 // loop_header_branch
      %12 = sbr.rel (%p10) target = $region8
    $region5: #{tpu_custom_call.1} parent=1 // loop_body
      %s14 = ssub.s32 %s9, 1
      %s15 = ssub.s32 %s9, 2
      %s16 = sadd.s32 %s9, 1
      %s18 = sadd.s32 %s17, 1
      %p21 = scmp.eq.s32.totalorder %s9, 1
      %p22 = scmp.ne.s32.totalorder %s17, %s19
      %p23 = scmp.eq.s32.totalorder %s9, 0
      %p24 = por %p22, %p23
      %p25 = scmp.ne.s32.totalorder %s17, %s19
      %p26 = scmp.eq.s32.totalorder %s14, 1
      %p27 = por %p25, %p26
      %p28 = scmp.ne.s32.totalorder %s19, %s20
      %p29 = scmp.eq.s32.totalorder %s14, 0
      %p30 = por %p28, %p29
      %p31 = scmp.ne.s32.totalorder %s19, %s20
      %p32 = scmp.eq.s32.totalorder %s15, 1
      %p33 = por %p31, %p32
      %p35 = scmp.ne.s32.totalorder %s20, %s34
      %p36 = scmp.eq.s32.totalorder %s15, 0
      %p37 = por %p35, %p36
      %s38 = ssub.s32 %s9, %s16
      %p39 = scmp.eq.s32.totalorder %s38, 0
      %s41 = sadd.s32 %s40, 1
      %s42 = scalar_select %p39, %s40, %s41
      %p45 = pneg %p39
      %p46 = scmp.eq.s32.totalorder %s9, 1
      %p47 = por %p45, %p46
      %p48 = scmp.ne.s32.totalorder %s40, %s43
      %p49 = scmp.eq.s32.totalorder %s9, 0
      %p50 = por %p48, %p49
      %p51 = scmp.ne.s32.totalorder %s40, %s43
      %p52 = scmp.eq.s32.totalorder %s14, 1
      %p53 = por %p51, %p52
      %p54 = scmp.ne.s32.totalorder %s43, %s44
      %p55 = scmp.eq.s32.totalorder %s14, 0
      %p56 = por %p54, %p55
      %p57 = scmp.ne.s32.totalorder %s43, %s44
      %p58 = scmp.eq.s32.totalorder %s15, 1
      %p59 = por %p57, %p58
      %p61 = scmp.ne.s32.totalorder %s44, %s60
      %p62 = scmp.eq.s32.totalorder %s15, 0
      %p63 = por %p61, %p62
      %s64 = ssub.s32 %s9, %s16
      %p65 = scmp.eq.s32.totalorder %s64, 0
      %s67 = sadd.s32 %s66, 1
      %s68 = scalar_select %p65, %s66, %s67
      %p71 = pneg %p65
      %p72 = scmp.eq.s32.totalorder %s9, 1
      %p73 = por %p71, %p72
      %p74 = scmp.ne.s32.totalorder %s66, %s69
      %p75 = scmp.eq.s32.totalorder %s9, 0
      %p76 = por %p74, %p75
      %p77 = scmp.ne.s32.totalorder %s66, %s69
      %p78 = scmp.eq.s32.totalorder %s14, 1
      %p79 = por %p77, %p78
      %p80 = scmp.ne.s32.totalorder %s69, %s70
      %p81 = scmp.eq.s32.totalorder %s14, 0
      %p82 = por %p80, %p81
      %p83 = scmp.ne.s32.totalorder %s69, %s70
      %p84 = scmp.eq.s32.totalorder %s15, 1
      %p85 = por %p83, %p84
      %p87 = scmp.ne.s32.totalorder %s70, %s86
      %p88 = scmp.eq.s32.totalorder %s15, 0
      %p89 = por %p87, %p88
      %p90 = scmp.le.s32.totalorder 1, %s9
      %p91 = scmp.lt.s32.totalorder %s9, 3
      %p92 = pnand %p90, %p91
      %p93 = pneg %p92
      // Predicated region
      $region9: #{tpu_custom_call.1} parent=5 // pred_check
        _
      $region10: #{tpu_custom_call.1} parent=5 // pred_check_branch
        %95 = sbr.rel (%p92) target = $region12
      $region11: #{tpu_custom_call.1} parent=5 // pred_region
        %s96 = ssub.s32 %s9, 1
        // Predicated region
        $region13: #{tpu_custom_call.1} parent=11 // pred_check
          %p97 = pneg %p30
        $region14: #{tpu_custom_call.1} parent=11 // pred_check_branch
          %99 = sbr.rel (%p97) target = $region16
        $region15: #{tpu_custom_call.1} parent=11 // pred_region
          %s101 = ssub.s32 9600, 9600
          %102 = vsyncadd [#allocation3], %s101
          %s103 = sshll.u32 [#allocation2], 4
          %s104 = int_to_ptr.vmem [resolvable:$true] %s103
          %109 = dma.hbm_to_vmem [thread:$0]  %s0, 9600, %s104, [#allocation3], 128, 128, 8
        $region16: #{tpu_custom_call.1} parent=11 // pred_fallthru
          _
      $region12: #{tpu_custom_call.1} parent=5 // pred_fallthru
        _
      %p110 = scmp.lt.s32.totalorder %s9, 2
      // Predicated region
      $region17: #{tpu_custom_call.1} parent=5 // pred_check
        %p111 = pneg %p110
      $region18: #{tpu_custom_call.1} parent=5 // pred_check_branch
        %113 = sbr.rel (%p111) target = $region20
      $region19: #{tpu_custom_call.1} parent=5 // pred_region
        // Predicated region
        $region21: #{tpu_custom_call.1} parent=19 // pred_check
          %p114 = pneg %p50
        $region22: #{tpu_custom_call.1} parent=19 // pred_check_branch
          %116 = sbr.rel (%p114) target = $region24
        $region23: #{tpu_custom_call.1} parent=19 // pred_region
          %p117 = scmp.lt.s32.totalorder %s9, 1
          %s118 = scalar_select %p117, %s9, 1
          %s119 = smul.addr %s118, 2
          %s120 = smul.addr %s119, 8
          %s121 = scalar_lea.vmem %s1, %s120
        $region24: #{tpu_custom_call.1} parent=19 // pred_fallthru
          _
      $region20: #{tpu_custom_call.1} parent=5 // pred_fallthru
        _
      %p122 = scmp.le.s32.totalorder 1, %s9
      %p123 = scmp.lt.s32.totalorder %s9, 3
      %p124 = pnand %p122, %p123
      %p125 = pneg %p124
      // Predicated region
      $region25: #{tpu_custom_call.1} parent=5 // pred_check
        _
      $region26: #{tpu_custom_call.1} parent=5 // pred_check_branch
        %127 = sbr.rel (%p124) target = $region28
      $region27: #{tpu_custom_call.1} parent=5 // pred_region
        %s128 = ssub.s32 %s9, 1
        // Predicated region
        $region29: #{tpu_custom_call.1} parent=27 // pred_check
          %p129 = pneg %p30
        $region30: #{tpu_custom_call.1} parent=27 // pred_check_branch
          %131 = sbr.rel (%p129) target = $region32
        $region31: #{tpu_custom_call.1} parent=27 // pred_region
          %132 = dma.done [#allocation3], 9600
        $region32: #{tpu_custom_call.1} parent=27 // pred_fallthru
          _
        %p133 = pneg %p30
        %p134 = pneg %p27
        %p135 = scmp.lt.s32.totalorder %s14, 1
        %s136 = scalar_select %p135, %s14, 1
        %s137 = smul.addr %s136, 2
        %s138 = smul.addr %s137, 8
        %s139 = scalar_lea.vmem %s1, %s138
        %p140 = pneg %p56
        %p141 = pneg %p53
        %p142 = pneg %p82
        %p143 = pneg %p79
        %p144 = scmp.lt.s32.totalorder %s14, 1
        %s145 = scalar_select %p144, %s14, 1
        %s146 = smul.addr %s145, 2
        %s147 = smul.addr %s146, 8
        %s148 = scalar_lea.vmem %s2, %s147
        %p149 = scmp.lt.s32.totalorder %s14, 1
        %s150 = scalar_select %p149, %s14, 1
        %s151 = smul.addr %s150, 2
        %s152 = smul.addr %s151, 8
        %s153 = scalar_lea.vmem %s1, %s152
        %p154 = scmp.lt.s32.totalorder %s14, 1
        %s155 = scalar_select %p154, %s14, 1
        %s156 = smul.addr %s155, 2
        %s157 = smul.addr %s156, 8
        %s158 = scalar_lea.vmem %s2, %s157
        %v159 = vld [vmem:[#allocation2 + $0x250] sm:$0x3f]
        %v160 = vld [vmem:[%s153] sm:$0xff]
        %v161 = vld [vmem:[%s153 + $0x8] sm:$0xff]
        %v162 = vld [vmem:[#allocation2] sm:$0xff]
        %v163 = vld [vmem:[#allocation2 + $0x8] sm:$0xff]
        %v164 = vld [vmem:[#allocation2 + $0x10] sm:$0xff]
        %v165 = vld [vmem:[#allocation2 + $0x18] sm:$0xff]
        %v166 = vld [vmem:[#allocation2 + $0x20] sm:$0xff]
        %v167 = vld [vmem:[#allocation2 + $0x28] sm:$0xff]
        %vm168 = vcmask 130048
        %v170 = vsel %vm168, %v162, 0
        %v173 = vsel %vm168, %v163, 0
        %v176 = vsel %vm168, %v164, 0
        %v179 = vsel %vm168, %v165, 0
        %v182 = vsel %vm168, %v166, 0
        %v185 = vsel %vm168, %v167, 0
        %187 = vmatprep.subr.mxu0 0.0
        %188 = vmatpush1.msra.mxu0 0.0
        %189 = vmatprep.subr.mxu0 0.0
        %190 = vmatpush1.msra.mxu0 0.0
        %191 = vmatprep.subr.mxu0 0.0
        %192 = vmatpush1.msra.mxu0 0.0
        %193 = vmatprep.subr.mxu0 0.0
        %194 = vmatpush1.msra.mxu0 0.0
        %195 = vmatprep.subr.mxu0 0.0
        %196 = vmatpush1.msra.mxu0 0.0
        %197 = vmatprep.subr.mxu0 0.0
        %198 = vmatpush1.msra.mxu0 0.0
        %199 = vmatprep.subr.mxu0 0.0
        %200 = vmatpush1.msra.mxu0 0.0
        %201 = vmatprep.subr.mxu0 0.0
        %202 = vmatpush1.msra.mxu0 0.0
        %203 = vmatprep.subr.mxu0 0.0
        %204 = vmatpush1.msra.mxu0 0.0
        %205 = vmatprep.subr.mxu0 0.0
        %206 = vmatpush1.msra.mxu0 0.0
        %207 = vmatprep.subr.mxu0 0.0
        %208 = vmatpush1.msra.mxu0 0.0
        %209 = vmatprep.subr.mxu0 0.0
        %210 = vmatpush1.msra.mxu0 0.0
        %211 = vmatprep.subr.mxu0 0.0
        %212 = vmatpush1.msra.mxu0 0.0
        %213 = vmatprep.subr.mxu0 0.0
        %214 = vmatpush1.msra.mxu0 0.0
        %215 = vmatprep.subr.mxu0 0.0
        %216 = vmatpush1.msra.mxu0 %v161
        %217 = vmatprep.subr.mxu0 0.0
        %218 = vmatpush1.msra.mxu0 %v160
        %219 = vmatprep.subr.mxu0 0.0
        %220 = vmatpush2.msra.mxu0 0.0
        %221 = vmatprep.subr.mxu0 0.0
        %222 = vmatpush2.msra.mxu0 0.0
        %223 = vmatprep.subr.mxu0 0.0
        %224 = vmatpush2.msra.mxu0 0.0
        %225 = vmatprep.subr.mxu0 0.0
        %226 = vmatpush2.msra.mxu0 0.0
        %227 = vmatprep.subr.mxu0 0.0
        %228 = vmatpush2.msra.mxu0 0.0
        %229 = vmatprep.subr.mxu0 0.0
        %230 = vmatpush2.msra.mxu0 0.0
        %231 = vmatprep.subr.mxu0 0.0
        %232 = vmatpush2.msra.mxu0 0.0
        %233 = vmatprep.subr.mxu0 0.0
        %234 = vmatpush2.msra.mxu0 0.0
        %235 = vmatprep.subr.mxu0 0.0
        %236 = vmatpush2.msra.mxu0 0.0
        %237 = vmatprep.subr.mxu0 0.0
        %238 = vmatpush2.msra.mxu0 0.0
        %239 = vmatprep.subr.mxu0 0.0
        %240 = vmatpush2.msra.mxu0 0.0
        %241 = vmatprep.subr.mxu0 0.0
        %242 = vmatpush2.msra.mxu0 0.0
        %243 = vmatprep.subr.mxu0 0.0
        %244 = vmatpush2.msra.mxu0 0.0
        %245 = vmatprep.subr.mxu0 0.0
        %246 = vmatpush2.msra.mxu0 0.0
        %247 = vmatprep.subr.mxu0 0.0
        %248 = vmatpush2.msra.mxu0 0.0
        %249 = vmatprep.subr.mxu0 0.0
        %250 = vmatpush2.msra.mxu0 0.0
        %251 = vmatprep.mubr.f32.mxu0 0.0
        %252 = vmatmul.mubr.f32.gmra.mxu0 %v170
        %v253 = vpop.f32.mrf.mxu0
        %v254 = vadd.f32 0.0, %v253
        %v255 = vpop.f32.mrf.mxu0
        %256 = vmatprep.mubr.f32.mxu0 0.0
        %257 = vmatmul.mubr.f32.gmra.mxu0 %v173
        %v258 = vpop.f32.mrf.mxu0
        %v259 = vadd.f32 0.0, %v258
        %v260 = vpop.f32.mrf.mxu0
        %261 = vmatprep.mubr.f32.mxu0 0.0
        %262 = vmatmul.mubr.f32.gmra.mxu0 %v176
        %v263 = vpop.f32.mrf.mxu0
        %v264 = vadd.f32 0.0, %v263
        %v265 = vpop.f32.mrf.mxu0
        %266 = vmatprep.mubr.f32.mxu0 0.0
        %267 = vmatmul.mubr.f32.gmra.mxu0 %v179
        %v268 = vpop.f32.mrf.mxu0
        %v269 = vadd.f32 0.0, %v268
        %v270 = vpop.f32.mrf.mxu0
        %271 = vmatprep.mubr.f32.mxu0 0.0
        %272 = vmatmul.mubr.f32.gmra.mxu0 %v182
        %v273 = vpop.f32.mrf.mxu0
        %v274 = vadd.f32 0.0, %v273
        %v275 = vpop.f32.mrf.mxu0
        %276 = vmatprep.mubr.f32.mxu0 0.0
        %277 = vmatmul.mubr.f32.gmra.mxu0 %v185
        %v278 = vpop.f32.mrf.mxu0
        %v279 = vadd.f32 0.0, %v278
        %v280 = vpop.f32.mrf.mxu0
        %281 = vdwg.mxu0
        %v282 = vld [vmem:[#allocation2 + $0x30] sm:$0xff]
        %v283 = vld [vmem:[#allocation2 + $0x38] sm:$0x1]
        %285 = vset.pattern.permute.xlu0 0
        %286 = vperm.xlu0 %285, %v254
        %v287 = vpop.permute.xlu0 %286
        %290 = vset.pattern.permute.xlu0 0
        %291 = vperm.xlu0 %290, %v259
        %v292 = vpop.permute.xlu0 %291
        %v294 = vlaneseq
        %v295 = vshrl.u32 %v294, 7
        %v296 = vsub.s32 0, %v295
        %v297 = vrot.slane %v282, %v296
        %v298 = vmul.f32 %v287, %v297
        %v299 = vmul.f32 %v292, %v297
        %300 = vset.pattern.permute.xlu0 1
        %301 = vperm.xlu0 %300, %v254
        %v302 = vpop.permute.xlu0 %301
        %304 = vset.pattern.permute.xlu0 1
        %305 = vperm.xlu0 %304, %v259
        %v306 = vpop.permute.xlu0 %305
        %v308 = vlaneseq
        %v309 = vshrl.u32 %v308, 7
        %v310 = vsub.s32 1, %v309
        %v311 = vrot.slane %v282, %v310
        %v312 = vmul.f32 %v302, %v311
        %v313 = vmul.f32 %v306, %v311
        %314 = vset.pattern.permute.xlu0 2
        %315 = vperm.xlu0 %314, %v254
        %v316 = vpop.permute.xlu0 %315
        %318 = vset.pattern.permute.xlu0 2
        %319 = vperm.xlu0 %318, %v259
        %v320 = vpop.permute.xlu0 %319
        %v322 = vlaneseq
        %v323 = vshrl.u32 %v322, 7
        %v324 = vsub.s32 2, %v323
        %v325 = vrot.slane %v282, %v324
        %v326 = vmul.f32 %v316, %v325
        %v327 = vmul.f32 %v320, %v325
        %329 = vset.pattern.permute.xlu0 0
        %330 = vperm.xlu0 %329, %v264
        %v331 = vpop.permute.xlu0 %330
        %334 = vset.pattern.permute.xlu0 0
        %335 = vperm.xlu0 %334, %v269
        %v336 = vpop.permute.xlu0 %335
        %v338 = vlaneseq
        %v339 = vshrl.u32 %v338, 7
        %v340 = vsub.s32 3, %v339
        %v341 = vrot.slane %v282, %v340
        %v342 = vmul.f32 %v331, %v341
        %v343 = vmul.f32 %v336, %v341
        %344 = vset.pattern.permute.xlu0 1
        %345 = vperm.xlu0 %344, %v264
        %v346 = vpop.permute.xlu0 %345
        %348 = vset.pattern.permute.xlu0 1
        %349 = vperm.xlu0 %348, %v269
        %v350 = vpop.permute.xlu0 %349
        %v352 = vlaneseq
        %v353 = vshrl.u32 %v352, 7
        %v354 = vsub.s32 4, %v353
        %v355 = vrot.slane %v282, %v354
        %v356 = vmul.f32 %v346, %v355
        %v357 = vmul.f32 %v350, %v355
        %358 = vset.pattern.permute.xlu0 2
        %359 = vperm.xlu0 %358, %v264
        %v360 = vpop.permute.xlu0 %359
        %362 = vset.pattern.permute.xlu0 2
        %363 = vperm.xlu0 %362, %v269
        %v364 = vpop.permute.xlu0 %363
        %v366 = vlaneseq
        %v367 = vshrl.u32 %v366, 7
        %v368 = vsub.s32 5, %v367
        %v369 = vrot.slane %v282, %v368
        %v370 = vmul.f32 %v360, %v369
        %v371 = vmul.f32 %v364, %v369
        %373 = vset.pattern.permute.xlu0 0
        %374 = vperm.xlu0 %373, %v274
        %v375 = vpop.permute.xlu0 %374
        %378 = vset.pattern.permute.xlu0 0
        %379 = vperm.xlu0 %378, %v279
        %v380 = vpop.permute.xlu0 %379
        %v382 = vlaneseq
        %v383 = vshrl.u32 %v382, 7
        %v384 = vsub.s32 6, %v383
        %v385 = vrot.slane %v282, %v384
        %v386 = vmul.f32 %v375, %v385
        %v387 = vmul.f32 %v380, %v385
        %388 = vset.pattern.permute.xlu0 1
        %389 = vperm.xlu0 %388, %v274
        %v390 = vpop.permute.xlu0 %389
        %392 = vset.pattern.permute.xlu0 1
        %393 = vperm.xlu0 %392, %v279
        %v394 = vpop.permute.xlu0 %393
        %v396 = vlaneseq
        %v397 = vshrl.u32 %v396, 7
        %v398 = vsub.s32 7, %v397
        %v399 = vrot.slane %v282, %v398
        %v400 = vmul.f32 %v390, %v399
        %v401 = vmul.f32 %v394, %v399
        %402 = vset.pattern.permute.xlu0 2
        %403 = vperm.xlu0 %402, %v274
        %v404 = vpop.permute.xlu0 %403
        %406 = vset.pattern.permute.xlu0 2
        %407 = vperm.xlu0 %406, %v279
        %v408 = vpop.permute.xlu0 %407
        %v410 = vlaneseq
        %v411 = vshrl.u32 %v410, 7
        %v412 = vsub.s32 0, %v411
        %v413 = vrot.slane %v283, %v412
        %v414 = vmul.f32 %v404, %v413
        %v415 = vmul.f32 %v408, %v413
        %v416 = vadd.f32 %v298, %v312
        %v417 = vadd.f32 %v299, %v313
        %v418 = vadd.f32 %v326, %v342
        %v419 = vadd.f32 %v327, %v343
        %v420 = vadd.f32 %v356, %v370
        %v421 = vadd.f32 %v357, %v371
        %v422 = vadd.f32 %v386, %v400
        %v423 = vadd.f32 %v387, %v401
        %v424 = vadd.f32 %v416, %v418
        %v425 = vadd.f32 %v417, %v419
        %v426 = vadd.f32 %v420, %v422
        %v427 = vadd.f32 %v421, %v423
        %v428 = vadd.f32 %v424, %v426
        %v429 = vadd.f32 %v425, %v427
        %v430 = vadd.f32 %v428, %v414
        %v431 = vadd.f32 %v429, %v415
        %v432 = vlaneseq
        %v433 = vshrl.u32 %v432, 7
        %v434 = vsub.s32 0, %v433
        %v435 = vrot.slane %v159, %v434
        %v436 = vadd.f32 %v430, %v435
        %v437 = vadd.f32 %v431, %v435
        %v438 = vmax.f32 %v436, 0.0
        %v439 = vmax.f32 %v437, 0.0
        %v440 = vld [vmem:[#allocation2 + $0x40] sm:$0xff]
        %v441 = vld [vmem:[#allocation2 + $0x48] sm:$0xff]
        %v442 = vld [vmem:[#allocation2 + $0x50] sm:$0xff]
        %v444 = vsel %vm168, %v440, 0
        %v447 = vsel %vm168, %v441, 0
        %v450 = vsel %vm168, %v442, 0
        %452 = vmatprep.subr.mxu0 0.0
        %453 = vmatpush1.msra.mxu0 0.0
        %454 = vmatprep.subr.mxu0 0.0
        %455 = vmatpush1.msra.mxu0 0.0
        %456 = vmatprep.subr.mxu0 0.0
        %457 = vmatpush1.msra.mxu0 0.0
        %458 = vmatprep.subr.mxu0 0.0
        %459 = vmatpush1.msra.mxu0 0.0
        %460 = vmatprep.subr.mxu0 0.0
        %461 = vmatpush1.msra.mxu0 0.0
        %462 = vmatprep.subr.mxu0 0.0
        %463 = vmatpush1.msra.mxu0 0.0
        %464 = vmatprep.subr.mxu0 0.0
        %465 = vmatpush1.msra.mxu0 0.0
        %466 = vmatprep.subr.mxu0 0.0
        %467 = vmatpush1.msra.mxu0 0.0
        %468 = vmatprep.subr.mxu0 0.0
        %469 = vmatpush1.msra.mxu0 0.0
        %470 = vmatprep.subr.mxu0 0.0
        %471 = vmatpush1.msra.mxu0 0.0
        %472 = vmatprep.subr.mxu0 0.0
        %473 = vmatpush1.msra.mxu0 0.0
        %474 = vmatprep.subr.mxu0 0.0
        %475 = vmatpush1.msra.mxu0 0.0
        %476 = vmatprep.subr.mxu0 0.0
        %477 = vmatpush1.msra.mxu0 0.0
        %478 = vmatprep.subr.mxu0 0.0
        %479 = vmatpush1.msra.mxu0 0.0
        %480 = vmatprep.subr.mxu0 0.0
        %481 = vmatpush1.msra.mxu0 %v439
        %482 = vmatprep.subr.mxu0 0.0
        %483 = vmatpush1.msra.mxu0 %v438
        %484 = vmatprep.subr.mxu0 0.0
        %485 = vmatpush2.msra.mxu0 0.0
        %486 = vmatprep.subr.mxu0 0.0
        %487 = vmatpush2.msra.mxu0 0.0
        %488 = vmatprep.subr.mxu0 0.0
        %489 = vmatpush2.msra.mxu0 0.0
        %490 = vmatprep.subr.mxu0 0.0
        %491 = vmatpush2.msra.mxu0 0.0
        %492 = vmatprep.subr.mxu0 0.0
        %493 = vmatpush2.msra.mxu0 0.0
        %494 = vmatprep.subr.mxu0 0.0
        %495 = vmatpush2.msra.mxu0 0.0
        %496 = vmatprep.subr.mxu0 0.0
        %497 = vmatpush2.msra.mxu0 0.0
        %498 = vmatprep.subr.mxu0 0.0
        %499 = vmatpush2.msra.mxu0 0.0
        %500 = vmatprep.subr.mxu0 0.0
        %501 = vmatpush2.msra.mxu0 0.0
        %502 = vmatprep.subr.mxu0 0.0
        %503 = vmatpush2.msra.mxu0 0.0
        %504 = vmatprep.subr.mxu0 0.0
        %505 = vmatpush2.msra.mxu0 0.0
        %506 = vmatprep.subr.mxu0 0.0
        %507 = vmatpush2.msra.mxu0 0.0
        %508 = vmatprep.subr.mxu0 0.0
        %509 = vmatpush2.msra.mxu0 0.0
        %510 = vmatprep.subr.mxu0 0.0
        %511 = vmatpush2.msra.mxu0 0.0
        %512 = vmatprep.subr.mxu0 0.0
        %513 = vmatpush2.msra.mxu0 0.0
        %514 = vmatprep.subr.mxu0 0.0
        %515 = vmatpush2.msra.mxu0 0.0
        %516 = vmatprep.mubr.f32.mxu0 0.0
        %517 = vmatmul.mubr.f32.gmra.mxu0 %v444
        %v518 = vpop.f32.mrf.mxu0
        %v519 = vadd.f32 0.0, %v518
        %v520 = vpop.f32.mrf.mxu0
        %521 = vmatprep.mubr.f32.mxu0 0.0
        %522 = vmatmul.mubr.f32.gmra.mxu0 %v447
        %v523 = vpop.f32.mrf.mxu0
        %v524 = vadd.f32 0.0, %v523
        %v525 = vpop.f32.mrf.mxu0
        %526 = vmatprep.mubr.f32.mxu0 0.0
        %527 = vmatmul.mubr.f32.gmra.mxu0 %v450
        %v528 = vpop.f32.mrf.mxu0
        %v529 = vadd.f32 0.0, %v528
        %v530 = vpop.f32.mrf.mxu0
        %531 = vdwg.mxu0
        %v532 = vld [vmem:[#allocation2 + $0x58] sm:$0xff]
        %v533 = vld [vmem:[#allocation2 + $0x60] sm:$0xff]
        %v534 = vld [vmem:[#allocation2 + $0x68] sm:$0xff]
        %v535 = vld [vmem:[#allocation2 + $0x70] sm:$0xff]
        %v536 = vld [vmem:[#allocation2 + $0x78] sm:$0xff]
        %v537 = vld [vmem:[#allocation2 + $0x80] sm:$0xff]
        %v539 = vsel %vm168, %v524, 0
        %541 = vmatprep.subr.mxu0 0.0
        %542 = vmatpush1.msra.mxu0 0.0
        %543 = vmatprep.subr.mxu0 0.0
        %544 = vmatpush1.msra.mxu0 0.0
        %545 = vmatprep.subr.mxu0 0.0
        %546 = vmatpush1.msra.mxu0 0.0
        %547 = vmatprep.subr.mxu0 0.0
        %548 = vmatpush1.msra.mxu0 0.0
        %549 = vmatprep.subr.mxu0 0.0
        %550 = vmatpush1.msra.mxu0 0.0
        %551 = vmatprep.subr.mxu0 0.0
        %552 = vmatpush1.msra.mxu0 0.0
        %553 = vmatprep.subr.mxu0 0.0
        %554 = vmatpush1.msra.mxu0 0.0
        %555 = vmatprep.subr.mxu0 0.0
        %556 = vmatpush1.msra.mxu0 0.0
        %557 = vmatprep.subr.mxu0 0.0
        %558 = vmatpush1.msra.mxu0 0.0
        %559 = vmatprep.subr.mxu0 0.0
        %560 = vmatpush1.msra.mxu0 0.0
        %561 = vmatprep.subr.mxu0 0.0
        %562 = vmatpush1.msra.mxu0 0.0
        %563 = vmatprep.subr.mxu0 0.0
        %564 = vmatpush1.msra.mxu0 0.0
        %565 = vmatprep.subr.mxu0 0.0
        %566 = vmatpush1.msra.mxu0 0.0
        %567 = vmatprep.subr.mxu0 0.0
        %568 = vmatpush1.msra.mxu0 0.0
        %569 = vmatprep.subr.mxu0 0.0
        %570 = vmatpush1.msra.mxu0 %v535
        %571 = vmatprep.subr.mxu0 0.0
        %572 = vmatpush1.msra.mxu0 %v534
        %573 = vmatprep.subr.mxu0 0.0
        %574 = vmatpush2.msra.mxu0 0.0
        %575 = vmatprep.subr.mxu0 0.0
        %576 = vmatpush2.msra.mxu0 0.0
        %577 = vmatprep.subr.mxu0 0.0
        %578 = vmatpush2.msra.mxu0 0.0
        %579 = vmatprep.subr.mxu0 0.0
        %580 = vmatpush2.msra.mxu0 0.0
        %581 = vmatprep.subr.mxu0 0.0
        %582 = vmatpush2.msra.mxu0 0.0
        %583 = vmatprep.subr.mxu0 0.0
        %584 = vmatpush2.msra.mxu0 0.0
        %585 = vmatprep.subr.mxu0 0.0
        %586 = vmatpush2.msra.mxu0 0.0
        %587 = vmatprep.subr.mxu0 0.0
        %588 = vmatpush2.msra.mxu0 0.0
        %589 = vmatprep.subr.mxu0 0.0
        %590 = vmatpush2.msra.mxu0 0.0
        %591 = vmatprep.subr.mxu0 0.0
        %592 = vmatpush2.msra.mxu0 0.0
        %593 = vmatprep.subr.mxu0 0.0
        %594 = vmatpush2.msra.mxu0 0.0
        %595 = vmatprep.subr.mxu0 0.0
        %596 = vmatpush2.msra.mxu0 0.0
        %597 = vmatprep.subr.mxu0 0.0
        %598 = vmatpush2.msra.mxu0 0.0
        %599 = vmatprep.subr.mxu0 0.0
        %600 = vmatpush2.msra.mxu0 0.0
        %601 = vmatprep.subr.mxu0 0.0
        %602 = vmatpush2.msra.mxu0 0.0
        %603 = vmatprep.subr.mxu0 0.0
        %604 = vmatpush2.msra.mxu0 0.0
        %605 = vmatprep.mubr.f32.mxu0 0.0
        %606 = vmatmul.mubr.f32.gmra.mxu0 %v539
        %v607 = vpop.f32.mrf.mxu0
        %v608 = vadd.f32 0.0, %v607
        %v609 = vpop.f32.mrf.mxu0
        %610 = vdwg.mxu0
        %v612 = vsel %vm168, %v529, 0
        %614 = vmatprep.subr.mxu0 0.0
        %615 = vmatpush1.msra.mxu0 0.0
        %616 = vmatprep.subr.mxu0 0.0
        %617 = vmatpush1.msra.mxu0 0.0
        %618 = vmatprep.subr.mxu0 0.0
        %619 = vmatpush1.msra.mxu0 0.0
        %620 = vmatprep.subr.mxu0 0.0
        %621 = vmatpush1.msra.mxu0 0.0
        %622 = vmatprep.subr.mxu0 0.0
        %623 = vmatpush1.msra.mxu0 0.0
        %624 = vmatprep.subr.mxu0 0.0
        %625 = vmatpush1.msra.mxu0 0.0
        %626 = vmatprep.subr.mxu0 0.0
        %627 = vmatpush1.msra.mxu0 0.0
        %628 = vmatprep.subr.mxu0 0.0
        %629 = vmatpush1.msra.mxu0 0.0
        %630 = vmatprep.subr.mxu0 0.0
        %631 = vmatpush1.msra.mxu0 0.0
        %632 = vmatprep.subr.mxu0 0.0
        %633 = vmatpush1.msra.mxu0 0.0
        %634 = vmatprep.subr.mxu0 0.0
        %635 = vmatpush1.msra.mxu0 0.0
        %636 = vmatprep.subr.mxu0 0.0
        %637 = vmatpush1.msra.mxu0 0.0
        %638 = vmatprep.subr.mxu0 0.0
        %639 = vmatpush1.msra.mxu0 0.0
        %640 = vmatprep.subr.mxu0 0.0
        %641 = vmatpush1.msra.mxu0 0.0
        %642 = vmatprep.subr.mxu0 0.0
        %643 = vmatpush1.msra.mxu0 %v537
        %644 = vmatprep.subr.mxu0 0.0
        %645 = vmatpush1.msra.mxu0 %v536
        %646 = vmatprep.subr.mxu0 0.0
        %647 = vmatpush2.msra.mxu0 0.0
        %648 = vmatprep.subr.mxu0 0.0
        %649 = vmatpush2.msra.mxu0 0.0
        %650 = vmatprep.subr.mxu0 0.0
        %651 = vmatpush2.msra.mxu0 0.0
        %652 = vmatprep.subr.mxu0 0.0
        %653 = vmatpush2.msra.mxu0 0.0
        %654 = vmatprep.subr.mxu0 0.0
        %655 = vmatpush2.msra.mxu0 0.0
        %656 = vmatprep.subr.mxu0 0.0
        %657 = vmatpush2.msra.mxu0 0.0
        %658 = vmatprep.subr.mxu0 0.0
        %659 = vmatpush2.msra.mxu0 0.0
        %660 = vmatprep.subr.mxu0 0.0
        %661 = vmatpush2.msra.mxu0 0.0
        %662 = vmatprep.subr.mxu0 0.0
        %663 = vmatpush2.msra.mxu0 0.0
        %664 = vmatprep.subr.mxu0 0.0
        %665 = vmatpush2.msra.mxu0 0.0
        %666 = vmatprep.subr.mxu0 0.0
        %667 = vmatpush2.msra.mxu0 0.0
        %668 = vmatprep.subr.mxu0 0.0
        %669 = vmatpush2.msra.mxu0 0.0
        %670 = vmatprep.subr.mxu0 0.0
        %671 = vmatpush2.msra.mxu0 0.0
        %672 = vmatprep.subr.mxu0 0.0
        %673 = vmatpush2.msra.mxu0 0.0
        %674 = vmatprep.subr.mxu0 0.0
        %675 = vmatpush2.msra.mxu0 0.0
        %676 = vmatprep.subr.mxu0 0.0
        %677 = vmatpush2.msra.mxu0 0.0
        %678 = vmatprep.mubr.f32.mxu0 0.0
        %679 = vmatmul.mubr.f32.gmra.mxu0 %v612
        %v680 = vpop.f32.mrf.mxu0
        %v681 = vadd.f32 0.0, %v680
        %v682 = vpop.f32.mrf.mxu0
        %683 = vdwg.mxu0
        %v685 = vsel %vm168, %v519, 0
        %687 = vmatprep.subr.mxu0 0.0
        %688 = vmatpush1.msra.mxu0 0.0
        %689 = vmatprep.subr.mxu0 0.0
        %690 = vmatpush1.msra.mxu0 0.0
        %691 = vmatprep.subr.mxu0 0.0
        %692 = vmatpush1.msra.mxu0 0.0
        %693 = vmatprep.subr.mxu0 0.0
        %694 = vmatpush1.msra.mxu0 0.0
        %695 = vmatprep.subr.mxu0 0.0
        %696 = vmatpush1.msra.mxu0 0.0
        %697 = vmatprep.subr.mxu0 0.0
        %698 = vmatpush1.msra.mxu0 0.0
        %699 = vmatprep.subr.mxu0 0.0
        %700 = vmatpush1.msra.mxu0 0.0
        %701 = vmatprep.subr.mxu0 0.0
        %702 = vmatpush1.msra.mxu0 0.0
        %703 = vmatprep.subr.mxu0 0.0
        %704 = vmatpush1.msra.mxu0 0.0
        %705 = vmatprep.subr.mxu0 0.0
        %706 = vmatpush1.msra.mxu0 0.0
        %707 = vmatprep.subr.mxu0 0.0
        %708 = vmatpush1.msra.mxu0 0.0
        %709 = vmatprep.subr.mxu0 0.0
        %710 = vmatpush1.msra.mxu0 0.0
        %711 = vmatprep.subr.mxu0 0.0
        %712 = vmatpush1.msra.mxu0 0.0
        %713 = vmatprep.subr.mxu0 0.0
        %714 = vmatpush1.msra.mxu0 0.0
        %715 = vmatprep.subr.mxu0 0.0
        %716 = vmatpush1.msra.mxu0 %v533
        %717 = vmatprep.subr.mxu0 0.0
        %718 = vmatpush1.msra.mxu0 %v532
        %719 = vmatprep.subr.mxu0 0.0
        %720 = vmatpush2.msra.mxu0 0.0
        %721 = vmatprep.subr.mxu0 0.0
        %722 = vmatpush2.msra.mxu0 0.0
        %723 = vmatprep.subr.mxu0 0.0
        %724 = vmatpush2.msra.mxu0 0.0
        %725 = vmatprep.subr.mxu0 0.0
        %726 = vmatpush2.msra.mxu0 0.0
        %727 = vmatprep.subr.mxu0 0.0
        %728 = vmatpush2.msra.mxu0 0.0
        %729 = vmatprep.subr.mxu0 0.0
        %730 = vmatpush2.msra.mxu0 0.0
        %731 = vmatprep.subr.mxu0 0.0
        %732 = vmatpush2.msra.mxu0 0.0
        %733 = vmatprep.subr.mxu0 0.0
        %734 = vmatpush2.msra.mxu0 0.0
        %735 = vmatprep.subr.mxu0 0.0
        %736 = vmatpush2.msra.mxu0 0.0
        %737 = vmatprep.subr.mxu0 0.0
        %738 = vmatpush2.msra.mxu0 0.0
        %739 = vmatprep.subr.mxu0 0.0
        %740 = vmatpush2.msra.mxu0 0.0
        %741 = vmatprep.subr.mxu0 0.0
        %742 = vmatpush2.msra.mxu0 0.0
        %743 = vmatprep.subr.mxu0 0.0
        %744 = vmatpush2.msra.mxu0 0.0
        %745 = vmatprep.subr.mxu0 0.0
        %746 = vmatpush2.msra.mxu0 0.0
        %747 = vmatprep.subr.mxu0 0.0
        %748 = vmatpush2.msra.mxu0 0.0
        %749 = vmatprep.subr.mxu0 0.0
        %750 = vmatpush2.msra.mxu0 0.0
        %751 = vmatprep.mubr.f32.mxu0 0.0
        %752 = vmatmul.mubr.f32.gmra.mxu0 %v685
        %v753 = vpop.f32.mrf.mxu0
        %v754 = vadd.f32 %v608, %v753
        %v755 = vpop.f32.mrf.mxu0
        %756 = vdwg.mxu0
        %v757 = vadd.f32 %v754, %v681
        %v758 = vlaneseq
        %v759 = vshrl.u32 %v758, 7
        %v760 = vsub.s32 1, %v759
        %v761 = vrot.slane %v159, %v760
        %v762 = vadd.f32 %v757, %v761
        %v763 = vmax.f32 %v762, 0.0
        %v764 = vld [vmem:[#allocation2 + $0x88] sm:$0xf]
        %vm765 = vcmask 64512
        %v767 = vsel %vm765, %v764, 0
        %769 = vmatprep.subr.mxu0 0.0
        %770 = vmatpush1.msra.mxu0 0.0
        %771 = vmatprep.subr.mxu0 0.0
        %772 = vmatpush1.msra.mxu0 0.0
        %773 = vmatprep.subr.mxu0 0.0
        %774 = vmatpush1.msra.mxu0 0.0
        %775 = vmatprep.subr.mxu0 0.0
        %776 = vmatpush1.msra.mxu0 0.0
        %777 = vmatprep.subr.mxu0 0.0
        %778 = vmatpush1.msra.mxu0 0.0
        %779 = vmatprep.subr.mxu0 0.0
        %780 = vmatpush1.msra.mxu0 0.0
        %781 = vmatprep.subr.mxu0 0.0
        %782 = vmatpush1.msra.mxu0 0.0
        %783 = vmatprep.subr.mxu0 0.0
        %784 = vmatpush1.msra.mxu0 0.0
        %785 = vmatprep.subr.mxu0 0.0
        %786 = vmatpush1.msra.mxu0 0.0
        %787 = vmatprep.subr.mxu0 0.0
        %788 = vmatpush1.msra.mxu0 0.0
        %789 = vmatprep.subr.mxu0 0.0
        %790 = vmatpush1.msra.mxu0 0.0
        %791 = vmatprep.subr.mxu0 0.0
        %792 = vmatpush1.msra.mxu0 0.0
        %793 = vmatprep.subr.mxu0 0.0
        %794 = vmatpush1.msra.mxu0 0.0
        %795 = vmatprep.subr.mxu0 0.0
        %796 = vmatpush1.msra.mxu0 0.0
        %797 = vmatprep.subr.mxu0 0.0
        %798 = vmatpush1.msra.mxu0 0.0
        %799 = vmatprep.subr.mxu0 0.0
        %800 = vmatpush1.msra.mxu0 %v763
        %801 = vmatprep.subr.mxu0 0.0
        %802 = vmatpush2.msra.mxu0 0.0
        %803 = vmatprep.subr.mxu0 0.0
        %804 = vmatpush2.msra.mxu0 0.0
        %805 = vmatprep.subr.mxu0 0.0
        %806 = vmatpush2.msra.mxu0 0.0
        %807 = vmatprep.subr.mxu0 0.0
        %808 = vmatpush2.msra.mxu0 0.0
        %809 = vmatprep.subr.mxu0 0.0
        %810 = vmatpush2.msra.mxu0 0.0
        %811 = vmatprep.subr.mxu0 0.0
        %812 = vmatpush2.msra.mxu0 0.0
        %813 = vmatprep.subr.mxu0 0.0
        %814 = vmatpush2.msra.mxu0 0.0
        %815 = vmatprep.subr.mxu0 0.0
        %816 = vmatpush2.msra.mxu0 0.0
        %817 = vmatprep.subr.mxu0 0.0
        %818 = vmatpush2.msra.mxu0 0.0
        %819 = vmatprep.subr.mxu0 0.0
        %820 = vmatpush2.msra.mxu0 0.0
        %821 = vmatprep.subr.mxu0 0.0
        %822 = vmatpush2.msra.mxu0 0.0
        %823 = vmatprep.subr.mxu0 0.0
        %824 = vmatpush2.msra.mxu0 0.0
        %825 = vmatprep.subr.mxu0 0.0
        %826 = vmatpush2.msra.mxu0 0.0
        %827 = vmatprep.subr.mxu0 0.0
        %828 = vmatpush2.msra.mxu0 0.0
        %829 = vmatprep.subr.mxu0 0.0
        %830 = vmatpush2.msra.mxu0 0.0
        %831 = vmatprep.subr.mxu0 0.0
        %832 = vmatpush2.msra.mxu0 0.0
        %833 = vmatprep.mubr.f32.mxu0 0.0
        %834 = vmatmul.mubr.f32.gmra.mxu0 %v767
        %v835 = vpop.f32.mrf.mxu0
        %v836 = vadd.f32 0.0, %v835
        %v837 = vpop.f32.mrf.mxu0
        %838 = vdwg.mxu0
        %v839 = vld [vmem:[#allocation2 + $0x90] sm:$0xff]
        %v840 = vld [vmem:[#allocation2 + $0x98] sm:$0xff]
        %v841 = vld [vmem:[#allocation2 + $0xa0] sm:$0xff]
        %v842 = vld [vmem:[#allocation2 + $0xa8] sm:$0xff]
        %v843 = vld [vmem:[#allocation2 + $0xb0] sm:$0xff]
        %v844 = vld [vmem:[#allocation2 + $0xb8] sm:$0xff]
        %v845 = vld [vmem:[#allocation2 + $0xc0] sm:$0xff]
        %v846 = vld [vmem:[#allocation2 + $0xc8] sm:$0xff]
        %v847 = vld [vmem:[#allocation2 + $0xd0] sm:$0xff]
        %v848 = vld [vmem:[#allocation2 + $0xd8] sm:$0xff]
        %v849 = vld [vmem:[#allocation2 + $0xe0] sm:$0xff]
        %v850 = vld [vmem:[#allocation2 + $0xe8] sm:$0xff]
        %v851 = vld [vmem:[#allocation2 + $0xf0] sm:$0xff]
        %v852 = vld [vmem:[#allocation2 + $0xf8] sm:$0xff]
        %v853 = vld [vmem:[#allocation2 + $0x100] sm:$0xff]
        %v854 = vld [vmem:[#allocation2 + $0x108] sm:$0xff]
        %v856 = vrot.slane %v836, 1
        %vm857 = vcmask 261120
        %v858 = vsel %vm857, %v856, 0
        %860 = vmatprep.subr.mxu0 0.0
        %861 = vmatpush1.msra.mxu0 0.0
        %862 = vmatprep.subr.mxu0 0.0
        %863 = vmatpush1.msra.mxu0 0.0
        %864 = vmatprep.subr.mxu0 0.0
        %865 = vmatpush1.msra.mxu0 0.0
        %866 = vmatprep.subr.mxu0 0.0
        %867 = vmatpush1.msra.mxu0 0.0
        %868 = vmatprep.subr.mxu0 0.0
        %869 = vmatpush1.msra.mxu0 0.0
        %870 = vmatprep.subr.mxu0 0.0
        %871 = vmatpush1.msra.mxu0 0.0
        %872 = vmatprep.subr.mxu0 0.0
        %873 = vmatpush1.msra.mxu0 0.0
        %874 = vmatprep.subr.mxu0 0.0
        %875 = vmatpush1.msra.mxu0 0.0
        %876 = vmatprep.subr.mxu0 0.0
        %877 = vmatpush1.msra.mxu0 0.0
        %878 = vmatprep.subr.mxu0 0.0
        %879 = vmatpush1.msra.mxu0 0.0
        %880 = vmatprep.subr.mxu0 0.0
        %881 = vmatpush1.msra.mxu0 0.0
        %882 = vmatprep.subr.mxu0 0.0
        %883 = vmatpush1.msra.mxu0 0.0
        %884 = vmatprep.subr.mxu0 0.0
        %885 = vmatpush1.msra.mxu0 %v846
        %886 = vmatprep.subr.mxu0 0.0
        %887 = vmatpush1.msra.mxu0 %v845
        %888 = vmatprep.subr.mxu0 0.0
        %889 = vmatpush1.msra.mxu0 %v844
        %890 = vmatprep.subr.mxu0 0.0
        %891 = vmatpush1.msra.mxu0 %v843
        %892 = vmatprep.subr.mxu0 0.0
        %893 = vmatpush2.msra.mxu0 0.0
        %894 = vmatprep.subr.mxu0 0.0
        %895 = vmatpush2.msra.mxu0 0.0
        %896 = vmatprep.subr.mxu0 0.0
        %897 = vmatpush2.msra.mxu0 0.0
        %898 = vmatprep.subr.mxu0 0.0
        %899 = vmatpush2.msra.mxu0 0.0
        %900 = vmatprep.subr.mxu0 0.0
        %901 = vmatpush2.msra.mxu0 0.0
        %902 = vmatprep.subr.mxu0 0.0
        %903 = vmatpush2.msra.mxu0 0.0
        %904 = vmatprep.subr.mxu0 0.0
        %905 = vmatpush2.msra.mxu0 0.0
        %906 = vmatprep.subr.mxu0 0.0
        %907 = vmatpush2.msra.mxu0 0.0
        %908 = vmatprep.subr.mxu0 0.0
        %909 = vmatpush2.msra.mxu0 0.0
        %910 = vmatprep.subr.mxu0 0.0
        %911 = vmatpush2.msra.mxu0 0.0
        %912 = vmatprep.subr.mxu0 0.0
        %913 = vmatpush2.msra.mxu0 0.0
        %914 = vmatprep.subr.mxu0 0.0
        %915 = vmatpush2.msra.mxu0 0.0
        %916 = vmatprep.subr.mxu0 0.0
        %917 = vmatpush2.msra.mxu0 0.0
        %918 = vmatprep.subr.mxu0 0.0
        %919 = vmatpush2.msra.mxu0 0.0
        %920 = vmatprep.subr.mxu0 0.0
        %921 = vmatpush2.msra.mxu0 0.0
        %922 = vmatprep.subr.mxu0 0.0
        %923 = vmatpush2.msra.mxu0 0.0
        %924 = vmatprep.mubr.f32.mxu0 0.0
        %925 = vmatmul.mubr.f32.gmra.mxu0 %v858
        %v926 = vpop.f32.mrf.mxu0
        %v927 = vadd.f32 0.0, %v926
        %v928 = vpop.f32.mrf.mxu0
        %929 = vdwg.mxu0
        %v930 = vrot.slane %v836, 3
        %v931 = vsel %vm857, %v930, 0
        %933 = vmatprep.subr.mxu0 0.0
        %934 = vmatpush1.msra.mxu0 0.0
        %935 = vmatprep.subr.mxu0 0.0
        %936 = vmatpush1.msra.mxu0 0.0
        %937 = vmatprep.subr.mxu0 0.0
        %938 = vmatpush1.msra.mxu0 0.0
        %939 = vmatprep.subr.mxu0 0.0
        %940 = vmatpush1.msra.mxu0 0.0
        %941 = vmatprep.subr.mxu0 0.0
        %942 = vmatpush1.msra.mxu0 0.0
        %943 = vmatprep.subr.mxu0 0.0
        %944 = vmatpush1.msra.mxu0 0.0
        %945 = vmatprep.subr.mxu0 0.0
        %946 = vmatpush1.msra.mxu0 0.0
        %947 = vmatprep.subr.mxu0 0.0
        %948 = vmatpush1.msra.mxu0 0.0
        %949 = vmatprep.subr.mxu0 0.0
        %950 = vmatpush1.msra.mxu0 0.0
        %951 = vmatprep.subr.mxu0 0.0
        %952 = vmatpush1.msra.mxu0 0.0
        %953 = vmatprep.subr.mxu0 0.0
        %954 = vmatpush1.msra.mxu0 0.0
        %955 = vmatprep.subr.mxu0 0.0
        %956 = vmatpush1.msra.mxu0 0.0
        %957 = vmatprep.subr.mxu0 0.0
        %958 = vmatpush1.msra.mxu0 %v854
        %959 = vmatprep.subr.mxu0 0.0
        %960 = vmatpush1.msra.mxu0 %v853
        %961 = vmatprep.subr.mxu0 0.0
        %962 = vmatpush1.msra.mxu0 %v852
        %963 = vmatprep.subr.mxu0 0.0
        %964 = vmatpush1.msra.mxu0 %v851
        %965 = vmatprep.subr.mxu0 0.0
        %966 = vmatpush2.msra.mxu0 0.0
        %967 = vmatprep.subr.mxu0 0.0
        %968 = vmatpush2.msra.mxu0 0.0
        %969 = vmatprep.subr.mxu0 0.0
        %970 = vmatpush2.msra.mxu0 0.0
        %971 = vmatprep.subr.mxu0 0.0
        %972 = vmatpush2.msra.mxu0 0.0
        %973 = vmatprep.subr.mxu0 0.0
        %974 = vmatpush2.msra.mxu0 0.0
        %975 = vmatprep.subr.mxu0 0.0
        %976 = vmatpush2.msra.mxu0 0.0
        %977 = vmatprep.subr.mxu0 0.0
        %978 = vmatpush2.msra.mxu0 0.0
        %979 = vmatprep.subr.mxu0 0.0
        %980 = vmatpush2.msra.mxu0 0.0
        %981 = vmatprep.subr.mxu0 0.0
        %982 = vmatpush2.msra.mxu0 0.0
        %983 = vmatprep.subr.mxu0 0.0
        %984 = vmatpush2.msra.mxu0 0.0
        %985 = vmatprep.subr.mxu0 0.0
        %986 = vmatpush2.msra.mxu0 0.0
        %987 = vmatprep.subr.mxu0 0.0
        %988 = vmatpush2.msra.mxu0 0.0
        %989 = vmatprep.subr.mxu0 0.0
        %990 = vmatpush2.msra.mxu0 0.0
        %991 = vmatprep.subr.mxu0 0.0
        %992 = vmatpush2.msra.mxu0 0.0
        %993 = vmatprep.subr.mxu0 0.0
        %994 = vmatpush2.msra.mxu0 0.0
        %995 = vmatprep.subr.mxu0 0.0
        %996 = vmatpush2.msra.mxu0 0.0
        %997 = vmatprep.mubr.f32.mxu0 0.0
        %998 = vmatmul.mubr.f32.gmra.mxu0 %v931
        %v999 = vpop.f32.mrf.mxu0
        %v1000 = vadd.f32 0.0, %v999
        %v1001 = vpop.f32.mrf.mxu0
        %1002 = vdwg.mxu0
        %v1003 = vsel %vm857, %v836, 0
        %1005 = vmatprep.subr.mxu0 0.0
        %1006 = vmatpush1.msra.mxu0 0.0
        %1007 = vmatprep.subr.mxu0 0.0
        %1008 = vmatpush1.msra.mxu0 0.0
        %1009 = vmatprep.subr.mxu0 0.0
        %1010 = vmatpush1.msra.mxu0 0.0
        %1011 = vmatprep.subr.mxu0 0.0
        %1012 = vmatpush1.msra.mxu0 0.0
        %1013 = vmatprep.subr.mxu0 0.0
        %1014 = vmatpush1.msra.mxu0 0.0
        %1015 = vmatprep.subr.mxu0 0.0
        %1016 = vmatpush1.msra.mxu0 0.0
        %1017 = vmatprep.subr.mxu0 0.0
        %1018 = vmatpush1.msra.mxu0 0.0
        %1019 = vmatprep.subr.mxu0 0.0
        %1020 = vmatpush1.msra.mxu0 0.0
        %1021 = vmatprep.subr.mxu0 0.0
        %1022 = vmatpush1.msra.mxu0 0.0
        %1023 = vmatprep.subr.mxu0 0.0
        %1024 = vmatpush1.msra.mxu0 0.0
        %1025 = vmatprep.subr.mxu0 0.0
        %1026 = vmatpush1.msra.mxu0 0.0
        %1027 = vmatprep.subr.mxu0 0.0
        %1028 = vmatpush1.msra.mxu0 0.0
        %1029 = vmatprep.subr.mxu0 0.0
        %1030 = vmatpush1.msra.mxu0 %v842
        %1031 = vmatprep.subr.mxu0 0.0
        %1032 = vmatpush1.msra.mxu0 %v841
        %1033 = vmatprep.subr.mxu0 0.0
        %1034 = vmatpush1.msra.mxu0 %v840
        %1035 = vmatprep.subr.mxu0 0.0
        %1036 = vmatpush1.msra.mxu0 %v839
        %1037 = vmatprep.subr.mxu0 0.0
        %1038 = vmatpush2.msra.mxu0 0.0
        %1039 = vmatprep.subr.mxu0 0.0
        %1040 = vmatpush2.msra.mxu0 0.0
        %1041 = vmatprep.subr.mxu0 0.0
        %1042 = vmatpush2.msra.mxu0 0.0
        %1043 = vmatprep.subr.mxu0 0.0
        %1044 = vmatpush2.msra.mxu0 0.0
        %1045 = vmatprep.subr.mxu0 0.0
        %1046 = vmatpush2.msra.mxu0 0.0
        %1047 = vmatprep.subr.mxu0 0.0
        %1048 = vmatpush2.msra.mxu0 0.0
        %1049 = vmatprep.subr.mxu0 0.0
        %1050 = vmatpush2.msra.mxu0 0.0
        %1051 = vmatprep.subr.mxu0 0.0
        %1052 = vmatpush2.msra.mxu0 0.0
        %1053 = vmatprep.subr.mxu0 0.0
        %1054 = vmatpush2.msra.mxu0 0.0
        %1055 = vmatprep.subr.mxu0 0.0
        %1056 = vmatpush2.msra.mxu0 0.0
        %1057 = vmatprep.subr.mxu0 0.0
        %1058 = vmatpush2.msra.mxu0 0.0
        %1059 = vmatprep.subr.mxu0 0.0
        %1060 = vmatpush2.msra.mxu0 0.0
        %1061 = vmatprep.subr.mxu0 0.0
        %1062 = vmatpush2.msra.mxu0 0.0
        %1063 = vmatprep.subr.mxu0 0.0
        %1064 = vmatpush2.msra.mxu0 0.0
        %1065 = vmatprep.subr.mxu0 0.0
        %1066 = vmatpush2.msra.mxu0 0.0
        %1067 = vmatprep.subr.mxu0 0.0
        %1068 = vmatpush2.msra.mxu0 0.0
        %1069 = vmatprep.mubr.f32.mxu0 0.0
        %1070 = vmatmul.mubr.f32.gmra.mxu0 %v1003
        %v1071 = vpop.f32.mrf.mxu0
        %v1072 = vadd.f32 %v927, %v1071
        %v1073 = vpop.f32.mrf.mxu0
        %1074 = vdwg.mxu0
        %v1075 = vrot.slane %v836, 2
        %v1076 = vsel %vm857, %v1075, 0
        %1078 = vmatprep.subr.mxu0 0.0
        %1079 = vmatpush1.msra.mxu0 0.0
        %1080 = vmatprep.subr.mxu0 0.0
        %1081 = vmatpush1.msra.mxu0 0.0
        %1082 = vmatprep.subr.mxu0 0.0
        %1083 = vmatpush1.msra.mxu0 0.0
        %1084 = vmatprep.subr.mxu0 0.0
        %1085 = vmatpush1.msra.mxu0 0.0
        %1086 = vmatprep.subr.mxu0 0.0
        %1087 = vmatpush1.msra.mxu0 0.0
        %1088 = vmatprep.subr.mxu0 0.0
        %1089 = vmatpush1.msra.mxu0 0.0
        %1090 = vmatprep.subr.mxu0 0.0
        %1091 = vmatpush1.msra.mxu0 0.0
        %1092 = vmatprep.subr.mxu0 0.0
        %1093 = vmatpush1.msra.mxu0 0.0
        %1094 = vmatprep.subr.mxu0 0.0
        %1095 = vmatpush1.msra.mxu0 0.0
        %1096 = vmatprep.subr.mxu0 0.0
        %1097 = vmatpush1.msra.mxu0 0.0
        %1098 = vmatprep.subr.mxu0 0.0
        %1099 = vmatpush1.msra.mxu0 0.0
        %1100 = vmatprep.subr.mxu0 0.0
        %1101 = vmatpush1.msra.mxu0 0.0
        %1102 = vmatprep.subr.mxu0 0.0
        %1103 = vmatpush1.msra.mxu0 %v850
        %1104 = vmatprep.subr.mxu0 0.0
        %1105 = vmatpush1.msra.mxu0 %v849
        %1106 = vmatprep.subr.mxu0 0.0
        %1107 = vmatpush1.msra.mxu0 %v848
        %1108 = vmatprep.subr.mxu0 0.0
        %1109 = vmatpush1.msra.mxu0 %v847
        %1110 = vmatprep.subr.mxu0 0.0
        %1111 = vmatpush2.msra.mxu0 0.0
        %1112 = vmatprep.subr.mxu0 0.0
        %1113 = vmatpush2.msra.mxu0 0.0
        %1114 = vmatprep.subr.mxu0 0.0
        %1115 = vmatpush2.msra.mxu0 0.0
        %1116 = vmatprep.subr.mxu0 0.0
        %1117 = vmatpush2.msra.mxu0 0.0
        %1118 = vmatprep.subr.mxu0 0.0
        %1119 = vmatpush2.msra.mxu0 0.0
        %1120 = vmatprep.subr.mxu0 0.0
        %1121 = vmatpush2.msra.mxu0 0.0
        %1122 = vmatprep.subr.mxu0 0.0
        %1123 = vmatpush2.msra.mxu0 0.0
        %1124 = vmatprep.subr.mxu0 0.0
        %1125 = vmatpush2.msra.mxu0 0.0
        %1126 = vmatprep.subr.mxu0 0.0
        %1127 = vmatpush2.msra.mxu0 0.0
        %1128 = vmatprep.subr.mxu0 0.0
        %1129 = vmatpush2.msra.mxu0 0.0
        %1130 = vmatprep.subr.mxu0 0.0
        %1131 = vmatpush2.msra.mxu0 0.0
        %1132 = vmatprep.subr.mxu0 0.0
        %1133 = vmatpush2.msra.mxu0 0.0
        %1134 = vmatprep.subr.mxu0 0.0
        %1135 = vmatpush2.msra.mxu0 0.0
        %1136 = vmatprep.subr.mxu0 0.0
        %1137 = vmatpush2.msra.mxu0 0.0
        %1138 = vmatprep.subr.mxu0 0.0
        %1139 = vmatpush2.msra.mxu0 0.0
        %1140 = vmatprep.subr.mxu0 0.0
        %1141 = vmatpush2.msra.mxu0 0.0
        %1142 = vmatprep.mubr.f32.mxu0 0.0
        %1143 = vmatmul.mubr.f32.gmra.mxu0 %v1076
        %v1144 = vpop.f32.mrf.mxu0
        %v1145 = vadd.f32 %v1000, %v1144
        %v1146 = vpop.f32.mrf.mxu0
        %1147 = vdwg.mxu0
        %v1148 = vadd.f32 %v1072, %v1145
        %v1150 = vrot.slane %v159, 2
        %v1152 = vadd.f32 %v1148, %v1150
        %v1153 = vld [vmem:[#allocation2 + $0x110] sm:$0xff]
        %v1154 = vrot.slane %v159, 3
        %v1157 = vsel %vm765, %v1152, 0
        %1159 = vmatprep.subr.mxu0 0.0
        %1160 = vmatpush1.msra.mxu0 0.0
        %1161 = vmatprep.subr.mxu0 0.0
        %1162 = vmatpush1.msra.mxu0 0.0
        %1163 = vmatprep.subr.mxu0 0.0
        %1164 = vmatpush1.msra.mxu0 0.0
        %1165 = vmatprep.subr.mxu0 0.0
        %1166 = vmatpush1.msra.mxu0 0.0
        %1167 = vmatprep.subr.mxu0 0.0
        %1168 = vmatpush1.msra.mxu0 0.0
        %1169 = vmatprep.subr.mxu0 0.0
        %1170 = vmatpush1.msra.mxu0 0.0
        %1171 = vmatprep.subr.mxu0 0.0
        %1172 = vmatpush1.msra.mxu0 0.0
        %1173 = vmatprep.subr.mxu0 0.0
        %1174 = vmatpush1.msra.mxu0 0.0
        %1175 = vmatprep.subr.mxu0 0.0
        %1176 = vmatpush1.msra.mxu0 0.0
        %1177 = vmatprep.subr.mxu0 0.0
        %1178 = vmatpush1.msra.mxu0 0.0
        %1179 = vmatprep.subr.mxu0 0.0
        %1180 = vmatpush1.msra.mxu0 0.0
        %1181 = vmatprep.subr.mxu0 0.0
        %1182 = vmatpush1.msra.mxu0 0.0
        %1183 = vmatprep.subr.mxu0 0.0
        %1184 = vmatpush1.msra.mxu0 0.0
        %1185 = vmatprep.subr.mxu0 0.0
        %1186 = vmatpush1.msra.mxu0 0.0
        %1187 = vmatprep.subr.mxu0 0.0
        %1188 = vmatpush1.msra.mxu0 0.0
        %1189 = vmatprep.subr.mxu0 0.0
        %1190 = vmatpush1.msra.mxu0 %v1153
        %1191 = vmatprep.subr.mxu0 0.0
        %1192 = vmatpush2.msra.mxu0 0.0
        %1193 = vmatprep.subr.mxu0 0.0
        %1194 = vmatpush2.msra.mxu0 0.0
        %1195 = vmatprep.subr.mxu0 0.0
        %1196 = vmatpush2.msra.mxu0 0.0
        %1197 = vmatprep.subr.mxu0 0.0
        %1198 = vmatpush2.msra.mxu0 0.0
        %1199 = vmatprep.subr.mxu0 0.0
        %1200 = vmatpush2.msra.mxu0 0.0
        %1201 = vmatprep.subr.mxu0 0.0
        %1202 = vmatpush2.msra.mxu0 0.0
        %1203 = vmatprep.subr.mxu0 0.0
        %1204 = vmatpush2.msra.mxu0 0.0
        %1205 = vmatprep.subr.mxu0 0.0
        %1206 = vmatpush2.msra.mxu0 0.0
        %1207 = vmatprep.subr.mxu0 0.0
        %1208 = vmatpush2.msra.mxu0 0.0
        %1209 = vmatprep.subr.mxu0 0.0
        %1210 = vmatpush2.msra.mxu0 0.0
        %1211 = vmatprep.subr.mxu0 0.0
        %1212 = vmatpush2.msra.mxu0 0.0
        %1213 = vmatprep.subr.mxu0 0.0
        %1214 = vmatpush2.msra.mxu0 0.0
        %1215 = vmatprep.subr.mxu0 0.0
        %1216 = vmatpush2.msra.mxu0 0.0
        %1217 = vmatprep.subr.mxu0 0.0
        %1218 = vmatpush2.msra.mxu0 0.0
        %1219 = vmatprep.subr.mxu0 0.0
        %1220 = vmatpush2.msra.mxu0 0.0
        %1221 = vmatprep.subr.mxu0 0.0
        %1222 = vmatpush2.msra.mxu0 0.0
        %1223 = vmatprep.mubr.f32.mxu0 0.0
        %1224 = vmatmul.mubr.f32.gmra.mxu0 %v1157
        %v1225 = vpop.f32.mrf.mxu0
        %v1226 = vadd.f32 %v1154, %v1225
        %v1227 = vpop.f32.mrf.mxu0
        %1228 = vdwg.mxu0
        %v1229 = vmax.f32 %v1226, 0.0
        %v1230 = vld [vmem:[#allocation2 + $0x118] sm:$0xff]
        %v1231 = vld [vmem:[#allocation2 + $0x120] sm:$0xff]
        %v1232 = vld [vmem:[#allocation2 + $0x128] sm:$0xff]
        %1234 = vset.pattern.permute.xlu0 0
        %1235 = vperm.xlu0 %1234, %v1230
        %v1236 = vpop.permute.xlu0 %1235
        %1239 = vset.pattern.permute.xlu0 0
        %1240 = vperm.xlu0 %1239, %v1231
        %v1241 = vpop.permute.xlu0 %1240
        %1244 = vset.pattern.permute.xlu0 0
        %1245 = vperm.xlu0 %1244, %v1232
        %v1246 = vpop.permute.xlu0 %1245
        %v1248 = vlaneseq
        %v1249 = vshrl.u32 %v1248, 7
        %v1250 = vsub.s32 0, %v1249
        %v1251 = vrot.slane %v1229, %v1250
        %v1252 = vmul.f32 %v1236, %v1251
        %v1253 = vmul.f32 %v1241, %v1251
        %v1254 = vmul.f32 %v1246, %v1251
        %1255 = vset.pattern.permute.xlu0 1
        %1256 = vperm.xlu0 %1255, %v1230
        %v1257 = vpop.permute.xlu0 %1256
        %1259 = vset.pattern.permute.xlu0 1
        %1260 = vperm.xlu0 %1259, %v1231
        %v1261 = vpop.permute.xlu0 %1260
        %1263 = vset.pattern.permute.xlu0 1
        %1264 = vperm.xlu0 %1263, %v1232
        %v1265 = vpop.permute.xlu0 %1264
        %v1267 = vmul.f32 %v1257, %v1251
        %v1268 = vmul.f32 %v1261, %v1251
        %v1269 = vmul.f32 %v1265, %v1251
        %1270 = vset.pattern.permute.xlu0 2
        %1271 = vperm.xlu0 %1270, %v1230
        %v1272 = vpop.permute.xlu0 %1271
        %1274 = vset.pattern.permute.xlu0 2
        %1275 = vperm.xlu0 %1274, %v1231
        %v1276 = vpop.permute.xlu0 %1275
        %1278 = vset.pattern.permute.xlu0 2
        %1279 = vperm.xlu0 %1278, %v1232
        %v1280 = vpop.permute.xlu0 %1279
        %v1282 = vmul.f32 %v1272, %v1251
        %v1283 = vmul.f32 %v1276, %v1251
        %v1284 = vmul.f32 %v1280, %v1251
        %1285 = vset.pattern.permute.xlu0 3
        %1286 = vperm.xlu0 %1285, %v1230
        %v1287 = vpop.permute.xlu0 %1286
        %1289 = vset.pattern.permute.xlu0 3
        %1290 = vperm.xlu0 %1289, %v1231
        %v1291 = vpop.permute.xlu0 %1290
        %1293 = vset.pattern.permute.xlu0 3
        %1294 = vperm.xlu0 %1293, %v1232
        %v1295 = vpop.permute.xlu0 %1294
        %v1297 = vmul.f32 %v1287, %v1251
        %v1298 = vmul.f32 %v1291, %v1251
        %v1299 = vmul.f32 %v1295, %v1251
        %1303 = vrot.lane.b32.xlu0 %v1267, 96
        %v1304 = vpop.permute.xlu0 %1303
        %1305 = vrot.lane.b32.xlu0 %v1268, 96
        %v1306 = vpop.permute.xlu0 %1305
        %1307 = vrot.lane.b32.xlu0 %v1269, 96
        %v1308 = vpop.permute.xlu0 %1307
        %v1312 = vadd.f32 %v1252, %v1304
        %v1313 = vadd.f32 %v1253, %v1306
        %v1314 = vadd.f32 %v1254, %v1308
        %1318 = vrot.lane.b32.xlu0 %v1297, 96
        %v1319 = vpop.permute.xlu0 %1318
        %1320 = vrot.lane.b32.xlu0 %v1298, 96
        %v1321 = vpop.permute.xlu0 %1320
        %1322 = vrot.lane.b32.xlu0 %v1299, 96
        %v1323 = vpop.permute.xlu0 %1322
        %v1327 = vadd.f32 %v1282, %v1319
        %v1328 = vadd.f32 %v1283, %v1321
        %v1329 = vadd.f32 %v1284, %v1323
        %1333 = vrot.lane.b32.xlu0 %v1327, 64
        %v1334 = vpop.permute.xlu0 %1333
        %1335 = vrot.lane.b32.xlu0 %v1328, 64
        %v1336 = vpop.permute.xlu0 %1335
        %1337 = vrot.lane.b32.xlu0 %v1329, 64
        %v1338 = vpop.permute.xlu0 %1337
        %v1342 = vadd.f32 %v1312, %v1334
        %v1343 = vadd.f32 %v1313, %v1336
        %v1344 = vadd.f32 %v1314, %v1338
        %v1345 = vld [vmem:[#allocation2 + $0x130] sm:$0xff]
        %v1346 = vld [vmem:[#allocation2 + $0x138] sm:$0xff]
        %v1347 = vld [vmem:[#allocation2 + $0x140] sm:$0xff]
        %v1348 = vld [vmem:[#allocation2 + $0x148] sm:$0xff]
        %v1349 = vld [vmem:[#allocation2 + $0x150] sm:$0xff]
        %v1350 = vld [vmem:[#allocation2 + $0x158] sm:$0xff]
        %v1351 = vld [vmem:[#allocation2 + $0x160] sm:$0xff]
        %v1352 = vld [vmem:[#allocation2 + $0x168] sm:$0xff]
        %v1353 = vld [vmem:[#allocation2 + $0x170] sm:$0xff]
        %v1354 = vld [vmem:[#allocation2 + $0x178] sm:$0xff]
        %v1355 = vld [vmem:[#allocation2 + $0x180] sm:$0xff]
        %v1356 = vld [vmem:[#allocation2 + $0x188] sm:$0xff]
        %v1358 = vsel %vm857, %v1343, 0
        %1360 = vmatprep.subr.mxu0 0.0
        %1361 = vmatpush1.msra.mxu0 0.0
        %1362 = vmatprep.subr.mxu0 0.0
        %1363 = vmatpush1.msra.mxu0 0.0
        %1364 = vmatprep.subr.mxu0 0.0
        %1365 = vmatpush1.msra.mxu0 0.0
        %1366 = vmatprep.subr.mxu0 0.0
        %1367 = vmatpush1.msra.mxu0 0.0
        %1368 = vmatprep.subr.mxu0 0.0
        %1369 = vmatpush1.msra.mxu0 0.0
        %1370 = vmatprep.subr.mxu0 0.0
        %1371 = vmatpush1.msra.mxu0 0.0
        %1372 = vmatprep.subr.mxu0 0.0
        %1373 = vmatpush1.msra.mxu0 0.0
        %1374 = vmatprep.subr.mxu0 0.0
        %1375 = vmatpush1.msra.mxu0 0.0
        %1376 = vmatprep.subr.mxu0 0.0
        %1377 = vmatpush1.msra.mxu0 0.0
        %1378 = vmatprep.subr.mxu0 0.0
        %1379 = vmatpush1.msra.mxu0 0.0
        %1380 = vmatprep.subr.mxu0 0.0
        %1381 = vmatpush1.msra.mxu0 0.0
        %1382 = vmatprep.subr.mxu0 0.0
        %1383 = vmatpush1.msra.mxu0 0.0
        %1384 = vmatprep.subr.mxu0 0.0
        %1385 = vmatpush1.msra.mxu0 %v1352
        %1386 = vmatprep.subr.mxu0 0.0
        %1387 = vmatpush1.msra.mxu0 %v1351
        %1388 = vmatprep.subr.mxu0 0.0
        %1389 = vmatpush1.msra.mxu0 %v1350
        %1390 = vmatprep.subr.mxu0 0.0
        %1391 = vmatpush1.msra.mxu0 %v1349
        %1392 = vmatprep.subr.mxu0 0.0
        %1393 = vmatpush2.msra.mxu0 0.0
        %1394 = vmatprep.subr.mxu0 0.0
        %1395 = vmatpush2.msra.mxu0 0.0
        %1396 = vmatprep.subr.mxu0 0.0
        %1397 = vmatpush2.msra.mxu0 0.0
        %1398 = vmatprep.subr.mxu0 0.0
        %1399 = vmatpush2.msra.mxu0 0.0
        %1400 = vmatprep.subr.mxu0 0.0
        %1401 = vmatpush2.msra.mxu0 0.0
        %1402 = vmatprep.subr.mxu0 0.0
        %1403 = vmatpush2.msra.mxu0 0.0
        %1404 = vmatprep.subr.mxu0 0.0
        %1405 = vmatpush2.msra.mxu0 0.0
        %1406 = vmatprep.subr.mxu0 0.0
        %1407 = vmatpush2.msra.mxu0 0.0
        %1408 = vmatprep.subr.mxu0 0.0
        %1409 = vmatpush2.msra.mxu0 0.0
        %1410 = vmatprep.subr.mxu0 0.0
        %1411 = vmatpush2.msra.mxu0 0.0
        %1412 = vmatprep.subr.mxu0 0.0
        %1413 = vmatpush2.msra.mxu0 0.0
        %1414 = vmatprep.subr.mxu0 0.0
        %1415 = vmatpush2.msra.mxu0 0.0
        %1416 = vmatprep.subr.mxu0 0.0
        %1417 = vmatpush2.msra.mxu0 0.0
        %1418 = vmatprep.subr.mxu0 0.0
        %1419 = vmatpush2.msra.mxu0 0.0
        %1420 = vmatprep.subr.mxu0 0.0
        %1421 = vmatpush2.msra.mxu0 0.0
        %1422 = vmatprep.subr.mxu0 0.0
        %1423 = vmatpush2.msra.mxu0 0.0
        %1424 = vmatprep.mubr.f32.mxu0 0.0
        %1425 = vmatmul.mubr.f32.gmra.mxu0 %v1358
        %v1426 = vpop.f32.mrf.mxu0
        %v1427 = vadd.f32 0.0, %v1426
        %v1428 = vpop.f32.mrf.mxu0
        %1429 = vdwg.mxu0
        %v1431 = vsel %vm857, %v1344, 0
        %1433 = vmatprep.subr.mxu0 0.0
        %1434 = vmatpush1.msra.mxu0 0.0
        %1435 = vmatprep.subr.mxu0 0.0
        %1436 = vmatpush1.msra.mxu0 0.0
        %1437 = vmatprep.subr.mxu0 0.0
        %1438 = vmatpush1.msra.mxu0 0.0
        %1439 = vmatprep.subr.mxu0 0.0
        %1440 = vmatpush1.msra.mxu0 0.0
        %1441 = vmatprep.subr.mxu0 0.0
        %1442 = vmatpush1.msra.mxu0 0.0
        %1443 = vmatprep.subr.mxu0 0.0
        %1444 = vmatpush1.msra.mxu0 0.0
        %1445 = vmatprep.subr.mxu0 0.0
        %1446 = vmatpush1.msra.mxu0 0.0
        %1447 = vmatprep.subr.mxu0 0.0
        %1448 = vmatpush1.msra.mxu0 0.0
        %1449 = vmatprep.subr.mxu0 0.0
        %1450 = vmatpush1.msra.mxu0 0.0
        %1451 = vmatprep.subr.mxu0 0.0
        %1452 = vmatpush1.msra.mxu0 0.0
        %1453 = vmatprep.subr.mxu0 0.0
        %1454 = vmatpush1.msra.mxu0 0.0
        %1455 = vmatprep.subr.mxu0 0.0
        %1456 = vmatpush1.msra.mxu0 0.0
        %1457 = vmatprep.subr.mxu0 0.0
        %1458 = vmatpush1.msra.mxu0 %v1356
        %1459 = vmatprep.subr.mxu0 0.0
        %1460 = vmatpush1.msra.mxu0 %v1355
        %1461 = vmatprep.subr.mxu0 0.0
        %1462 = vmatpush1.msra.mxu0 %v1354
        %1463 = vmatprep.subr.mxu0 0.0
        %1464 = vmatpush1.msra.mxu0 %v1353
        %1465 = vmatprep.subr.mxu0 0.0
        %1466 = vmatpush2.msra.mxu0 0.0
        %1467 = vmatprep.subr.mxu0 0.0
        %1468 = vmatpush2.msra.mxu0 0.0
        %1469 = vmatprep.subr.mxu0 0.0
        %1470 = vmatpush2.msra.mxu0 0.0
        %1471 = vmatprep.subr.mxu0 0.0
        %1472 = vmatpush2.msra.mxu0 0.0
        %1473 = vmatprep.subr.mxu0 0.0
        %1474 = vmatpush2.msra.mxu0 0.0
        %1475 = vmatprep.subr.mxu0 0.0
        %1476 = vmatpush2.msra.mxu0 0.0
        %1477 = vmatprep.subr.mxu0 0.0
        %1478 = vmatpush2.msra.mxu0 0.0
        %1479 = vmatprep.subr.mxu0 0.0
        %1480 = vmatpush2.msra.mxu0 0.0
        %1481 = vmatprep.subr.mxu0 0.0
        %1482 = vmatpush2.msra.mxu0 0.0
        %1483 = vmatprep.subr.mxu0 0.0
        %1484 = vmatpush2.msra.mxu0 0.0
        %1485 = vmatprep.subr.mxu0 0.0
        %1486 = vmatpush2.msra.mxu0 0.0
        %1487 = vmatprep.subr.mxu0 0.0
        %1488 = vmatpush2.msra.mxu0 0.0
        %1489 = vmatprep.subr.mxu0 0.0
        %1490 = vmatpush2.msra.mxu0 0.0
        %1491 = vmatprep.subr.mxu0 0.0
        %1492 = vmatpush2.msra.mxu0 0.0
        %1493 = vmatprep.subr.mxu0 0.0
        %1494 = vmatpush2.msra.mxu0 0.0
        %1495 = vmatprep.subr.mxu0 0.0
        %1496 = vmatpush2.msra.mxu0 0.0
        %1497 = vmatprep.mubr.f32.mxu0 0.0
        %1498 = vmatmul.mubr.f32.gmra.mxu0 %v1431
        %v1499 = vpop.f32.mrf.mxu0
        %v1500 = vadd.f32 0.0, %v1499
        %v1501 = vpop.f32.mrf.mxu0
        %1502 = vdwg.mxu0
        %v1504 = vsel %vm857, %v1342, 0
        %1506 = vmatprep.subr.mxu0 0.0
        %1507 = vmatpush1.msra.mxu0 0.0
        %1508 = vmatprep.subr.mxu0 0.0
        %1509 = vmatpush1.msra.mxu0 0.0
        %1510 = vmatprep.subr.mxu0 0.0
        %1511 = vmatpush1.msra.mxu0 0.0
        %1512 = vmatprep.subr.mxu0 0.0
        %1513 = vmatpush1.msra.mxu0 0.0
        %1514 = vmatprep.subr.mxu0 0.0
        %1515 = vmatpush1.msra.mxu0 0.0
        %1516 = vmatprep.subr.mxu0 0.0
        %1517 = vmatpush1.msra.mxu0 0.0
        %1518 = vmatprep.subr.mxu0 0.0
        %1519 = vmatpush1.msra.mxu0 0.0
        %1520 = vmatprep.subr.mxu0 0.0
        %1521 = vmatpush1.msra.mxu0 0.0
        %1522 = vmatprep.subr.mxu0 0.0
        %1523 = vmatpush1.msra.mxu0 0.0
        %1524 = vmatprep.subr.mxu0 0.0
        %1525 = vmatpush1.msra.mxu0 0.0
        %1526 = vmatprep.subr.mxu0 0.0
        %1527 = vmatpush1.msra.mxu0 0.0
        %1528 = vmatprep.subr.mxu0 0.0
        %1529 = vmatpush1.msra.mxu0 0.0
        %1530 = vmatprep.subr.mxu0 0.0
        %1531 = vmatpush1.msra.mxu0 %v1348
        %1532 = vmatprep.subr.mxu0 0.0
        %1533 = vmatpush1.msra.mxu0 %v1347
        %1534 = vmatprep.subr.mxu0 0.0
        %1535 = vmatpush1.msra.mxu0 %v1346
        %1536 = vmatprep.subr.mxu0 0.0
        %1537 = vmatpush1.msra.mxu0 %v1345
        %1538 = vmatprep.subr.mxu0 0.0
        %1539 = vmatpush2.msra.mxu0 0.0
        %1540 = vmatprep.subr.mxu0 0.0
        %1541 = vmatpush2.msra.mxu0 0.0
        %1542 = vmatprep.subr.mxu0 0.0
        %1543 = vmatpush2.msra.mxu0 0.0
        %1544 = vmatprep.subr.mxu0 0.0
        %1545 = vmatpush2.msra.mxu0 0.0
        %1546 = vmatprep.subr.mxu0 0.0
        %1547 = vmatpush2.msra.mxu0 0.0
        %1548 = vmatprep.subr.mxu0 0.0
        %1549 = vmatpush2.msra.mxu0 0.0
        %1550 = vmatprep.subr.mxu0 0.0
        %1551 = vmatpush2.msra.mxu0 0.0
        %1552 = vmatprep.subr.mxu0 0.0
        %1553 = vmatpush2.msra.mxu0 0.0
        %1554 = vmatprep.subr.mxu0 0.0
        %1555 = vmatpush2.msra.mxu0 0.0
        %1556 = vmatprep.subr.mxu0 0.0
        %1557 = vmatpush2.msra.mxu0 0.0
        %1558 = vmatprep.subr.mxu0 0.0
        %1559 = vmatpush2.msra.mxu0 0.0
        %1560 = vmatprep.subr.mxu0 0.0
        %1561 = vmatpush2.msra.mxu0 0.0
        %1562 = vmatprep.subr.mxu0 0.0
        %1563 = vmatpush2.msra.mxu0 0.0
        %1564 = vmatprep.subr.mxu0 0.0
        %1565 = vmatpush2.msra.mxu0 0.0
        %1566 = vmatprep.subr.mxu0 0.0
        %1567 = vmatpush2.msra.mxu0 0.0
        %1568 = vmatprep.subr.mxu0 0.0
        %1569 = vmatpush2.msra.mxu0 0.0
        %1570 = vmatprep.mubr.f32.mxu0 0.0
        %1571 = vmatmul.mubr.f32.gmra.mxu0 %v1504
        %v1572 = vpop.f32.mrf.mxu0
        %v1573 = vadd.f32 %v1427, %v1572
        %v1574 = vpop.f32.mrf.mxu0
        %1575 = vdwg.mxu0
        %v1576 = vadd.f32 %v1573, %v1500
        %v1577 = vlaneseq
        %v1578 = vshrl.u32 %v1577, 7
        %v1579 = vsub.s32 4, %v1578
        %v1580 = vrot.slane %v159, %v1579
        %v1581 = vadd.f32 %v1576, %v1580
        %v1582 = vmax.f32 %v1581, 0.0
        %v1583 = vld [vmem:[#allocation2 + $0x190] sm:$0xff]
        %v1584 = vld [vmem:[#allocation2 + $0x198] sm:$0xff]
        %v1585 = vld [vmem:[#allocation2 + $0x1a0] sm:$0xff]
        %v1586 = vld [vmem:[#allocation2 + $0x1a8] sm:$0xff]
        %v1587 = vld [vmem:[#allocation2 + $0x1b0] sm:$0xff]
        %v1588 = vld [vmem:[#allocation2 + $0x1b8] sm:$0xff]
        %v1590 = vsel %vm765, %v1583, 0
        %v1593 = vsel %vm765, %v1584, 0
        %v1596 = vsel %vm765, %v1585, 0
        %v1599 = vsel %vm765, %v1586, 0
        %v1602 = vsel %vm765, %v1587, 0
        %v1605 = vsel %vm765, %v1588, 0
        %1607 = vmatprep.subr.mxu0 0.0
        %1608 = vmatpush1.msra.mxu0 0.0
        %1609 = vmatprep.subr.mxu0 0.0
        %1610 = vmatpush1.msra.mxu0 0.0
        %1611 = vmatprep.subr.mxu0 0.0
        %1612 = vmatpush1.msra.mxu0 0.0
        %1613 = vmatprep.subr.mxu0 0.0
        %1614 = vmatpush1.msra.mxu0 0.0
        %1615 = vmatprep.subr.mxu0 0.0
        %1616 = vmatpush1.msra.mxu0 0.0
        %1617 = vmatprep.subr.mxu0 0.0
        %1618 = vmatpush1.msra.mxu0 0.0
        %1619 = vmatprep.subr.mxu0 0.0
        %1620 = vmatpush1.msra.mxu0 0.0
        %1621 = vmatprep.subr.mxu0 0.0
        %1622 = vmatpush1.msra.mxu0 0.0
        %1623 = vmatprep.subr.mxu0 0.0
        %1624 = vmatpush1.msra.mxu0 0.0
        %1625 = vmatprep.subr.mxu0 0.0
        %1626 = vmatpush1.msra.mxu0 0.0
        %1627 = vmatprep.subr.mxu0 0.0
        %1628 = vmatpush1.msra.mxu0 0.0
        %1629 = vmatprep.subr.mxu0 0.0
        %1630 = vmatpush1.msra.mxu0 0.0
        %1631 = vmatprep.subr.mxu0 0.0
        %1632 = vmatpush1.msra.mxu0 0.0
        %1633 = vmatprep.subr.mxu0 0.0
        %1634 = vmatpush1.msra.mxu0 0.0
        %1635 = vmatprep.subr.mxu0 0.0
        %1636 = vmatpush1.msra.mxu0 0.0
        %1637 = vmatprep.subr.mxu0 0.0
        %1638 = vmatpush1.msra.mxu0 %v1582
        %1639 = vmatprep.subr.mxu0 0.0
        %1640 = vmatpush2.msra.mxu0 0.0
        %1641 = vmatprep.subr.mxu0 0.0
        %1642 = vmatpush2.msra.mxu0 0.0
        %1643 = vmatprep.subr.mxu0 0.0
        %1644 = vmatpush2.msra.mxu0 0.0
        %1645 = vmatprep.subr.mxu0 0.0
        %1646 = vmatpush2.msra.mxu0 0.0
        %1647 = vmatprep.subr.mxu0 0.0
        %1648 = vmatpush2.msra.mxu0 0.0
        %1649 = vmatprep.subr.mxu0 0.0
        %1650 = vmatpush2.msra.mxu0 0.0
        %1651 = vmatprep.subr.mxu0 0.0
        %1652 = vmatpush2.msra.mxu0 0.0
        %1653 = vmatprep.subr.mxu0 0.0
        %1654 = vmatpush2.msra.mxu0 0.0
        %1655 = vmatprep.subr.mxu0 0.0
        %1656 = vmatpush2.msra.mxu0 0.0
        %1657 = vmatprep.subr.mxu0 0.0
        %1658 = vmatpush2.msra.mxu0 0.0
        %1659 = vmatprep.subr.mxu0 0.0
        %1660 = vmatpush2.msra.mxu0 0.0
        %1661 = vmatprep.subr.mxu0 0.0
        %1662 = vmatpush2.msra.mxu0 0.0
        %1663 = vmatprep.subr.mxu0 0.0
        %1664 = vmatpush2.msra.mxu0 0.0
        %1665 = vmatprep.subr.mxu0 0.0
        %1666 = vmatpush2.msra.mxu0 0.0
        %1667 = vmatprep.subr.mxu0 0.0
        %1668 = vmatpush2.msra.mxu0 0.0
        %1669 = vmatprep.subr.mxu0 0.0
        %1670 = vmatpush2.msra.mxu0 0.0
        %1671 = vmatprep.mubr.f32.mxu0 0.0
        %1672 = vmatmul.mubr.f32.gmra.mxu0 %v1590
        %v1673 = vpop.f32.mrf.mxu0
        %v1674 = vadd.f32 0.0, %v1673
        %v1675 = vpop.f32.mrf.mxu0
        %1676 = vmatprep.mubr.f32.mxu0 0.0
        %1677 = vmatmul.mubr.f32.gmra.mxu0 %v1593
        %v1678 = vpop.f32.mrf.mxu0
        %v1679 = vadd.f32 0.0, %v1678
        %v1680 = vpop.f32.mrf.mxu0
        %1681 = vmatprep.mubr.f32.mxu0 0.0
        %1682 = vmatmul.mubr.f32.gmra.mxu0 %v1596
        %v1683 = vpop.f32.mrf.mxu0
        %v1684 = vadd.f32 0.0, %v1683
        %v1685 = vpop.f32.mrf.mxu0
        %1686 = vmatprep.mubr.f32.mxu0 0.0
        %1687 = vmatmul.mubr.f32.gmra.mxu0 %v1599
        %v1688 = vpop.f32.mrf.mxu0
        %v1689 = vadd.f32 0.0, %v1688
        %v1690 = vpop.f32.mrf.mxu0
        %1691 = vmatprep.mubr.f32.mxu0 0.0
        %1692 = vmatmul.mubr.f32.gmra.mxu0 %v1602
        %v1693 = vpop.f32.mrf.mxu0
        %v1694 = vadd.f32 0.0, %v1693
        %v1695 = vpop.f32.mrf.mxu0
        %1696 = vmatprep.mubr.f32.mxu0 0.0
        %1697 = vmatmul.mubr.f32.gmra.mxu0 %v1605
        %v1698 = vpop.f32.mrf.mxu0
        %v1699 = vadd.f32 0.0, %v1698
        %v1700 = vpop.f32.mrf.mxu0
        %1701 = vdwg.mxu0
        %v1702 = vld [vmem:[#allocation2 + $0x1c0] sm:$0xff]
        %v1703 = vld [vmem:[#allocation2 + $0x1c8] sm:$0xff]
        %v1704 = vld [vmem:[#allocation2 + $0x1d0] sm:$0xff]
        %v1705 = vld [vmem:[#allocation2 + $0x1d8] sm:$0xff]
        %v1706 = vld [vmem:[#allocation2 + $0x1e0] sm:$0xff]
        %v1707 = vld [vmem:[#allocation2 + $0x1e8] sm:$0xff]
        %v1708 = vld [vmem:[#allocation2 + $0x1f0] sm:$0xff]
        %v1709 = vld [vmem:[#allocation2 + $0x1f8] sm:$0xff]
        %v1710 = vld [vmem:[#allocation2 + $0x200] sm:$0xff]
        %v1711 = vld [vmem:[#allocation2 + $0x208] sm:$0xff]
        %v1712 = vld [vmem:[#allocation2 + $0x210] sm:$0xff]
        %v1713 = vld [vmem:[#allocation2 + $0x218] sm:$0xff]
        %v1715 = vsel %vm857, %v1684, 0
        %v1718 = vsel %vm857, %v1689, 0
        %1720 = vmatprep.subr.mxu0 0.0
        %1721 = vmatpush1.msra.mxu0 0.0
        %1722 = vmatprep.subr.mxu0 0.0
        %1723 = vmatpush1.msra.mxu0 0.0
        %1724 = vmatprep.subr.mxu0 0.0
        %1725 = vmatpush1.msra.mxu0 0.0
        %1726 = vmatprep.subr.mxu0 0.0
        %1727 = vmatpush1.msra.mxu0 0.0
        %1728 = vmatprep.subr.mxu0 0.0
        %1729 = vmatpush1.msra.mxu0 0.0
        %1730 = vmatprep.subr.mxu0 0.0
        %1731 = vmatpush1.msra.mxu0 0.0
        %1732 = vmatprep.subr.mxu0 0.0
        %1733 = vmatpush1.msra.mxu0 0.0
        %1734 = vmatprep.subr.mxu0 0.0
        %1735 = vmatpush1.msra.mxu0 0.0
        %1736 = vmatprep.subr.mxu0 0.0
        %1737 = vmatpush1.msra.mxu0 0.0
        %1738 = vmatprep.subr.mxu0 0.0
        %1739 = vmatpush1.msra.mxu0 0.0
        %1740 = vmatprep.subr.mxu0 0.0
        %1741 = vmatpush1.msra.mxu0 0.0
        %1742 = vmatprep.subr.mxu0 0.0
        %1743 = vmatpush1.msra.mxu0 0.0
        %1744 = vmatprep.subr.mxu0 0.0
        %1745 = vmatpush1.msra.mxu0 %v1709
        %1746 = vmatprep.subr.mxu0 0.0
        %1747 = vmatpush1.msra.mxu0 %v1708
        %1748 = vmatprep.subr.mxu0 0.0
        %1749 = vmatpush1.msra.mxu0 %v1707
        %1750 = vmatprep.subr.mxu0 0.0
        %1751 = vmatpush1.msra.mxu0 %v1706
        %1752 = vmatprep.subr.mxu0 0.0
        %1753 = vmatpush2.msra.mxu0 0.0
        %1754 = vmatprep.subr.mxu0 0.0
        %1755 = vmatpush2.msra.mxu0 0.0
        %1756 = vmatprep.subr.mxu0 0.0
        %1757 = vmatpush2.msra.mxu0 0.0
        %1758 = vmatprep.subr.mxu0 0.0
        %1759 = vmatpush2.msra.mxu0 0.0
        %1760 = vmatprep.subr.mxu0 0.0
        %1761 = vmatpush2.msra.mxu0 0.0
        %1762 = vmatprep.subr.mxu0 0.0
        %1763 = vmatpush2.msra.mxu0 0.0
        %1764 = vmatprep.subr.mxu0 0.0
        %1765 = vmatpush2.msra.mxu0 0.0
        %1766 = vmatprep.subr.mxu0 0.0
        %1767 = vmatpush2.msra.mxu0 0.0
        %1768 = vmatprep.subr.mxu0 0.0
        %1769 = vmatpush2.msra.mxu0 0.0
        %1770 = vmatprep.subr.mxu0 0.0
        %1771 = vmatpush2.msra.mxu0 0.0
        %1772 = vmatprep.subr.mxu0 0.0
        %1773 = vmatpush2.msra.mxu0 0.0
        %1774 = vmatprep.subr.mxu0 0.0
        %1775 = vmatpush2.msra.mxu0 0.0
        %1776 = vmatprep.subr.mxu0 0.0
        %1777 = vmatpush2.msra.mxu0 0.0
        %1778 = vmatprep.subr.mxu0 0.0
        %1779 = vmatpush2.msra.mxu0 0.0
        %1780 = vmatprep.subr.mxu0 0.0
        %1781 = vmatpush2.msra.mxu0 0.0
        %1782 = vmatprep.subr.mxu0 0.0
        %1783 = vmatpush2.msra.mxu0 0.0
        %1784 = vmatprep.mubr.f32.mxu0 0.0
        %1785 = vmatmul.mubr.f32.gmra.mxu0 %v1715
        %v1786 = vpop.f32.mrf.mxu0
        %v1787 = vadd.f32 0.0, %v1786
        %v1788 = vpop.f32.mrf.mxu0
        %1789 = vmatprep.mubr.f32.mxu0 0.0
        %1790 = vmatmul.mubr.f32.gmra.mxu0 %v1718
        %v1791 = vpop.f32.mrf.mxu0
        %v1792 = vadd.f32 0.0, %v1791
        %v1793 = vpop.f32.mrf.mxu0
        %1794 = vdwg.mxu0
        %v1796 = vsel %vm857, %v1694, 0
        %v1799 = vsel %vm857, %v1699, 0
        %1801 = vmatprep.subr.mxu0 0.0
        %1802 = vmatpush1.msra.mxu0 0.0
        %1803 = vmatprep.subr.mxu0 0.0
        %1804 = vmatpush1.msra.mxu0 0.0
        %1805 = vmatprep.subr.mxu0 0.0
        %1806 = vmatpush1.msra.mxu0 0.0
        %1807 = vmatprep.subr.mxu0 0.0
        %1808 = vmatpush1.msra.mxu0 0.0
        %1809 = vmatprep.subr.mxu0 0.0
        %1810 = vmatpush1.msra.mxu0 0.0
        %1811 = vmatprep.subr.mxu0 0.0
        %1812 = vmatpush1.msra.mxu0 0.0
        %1813 = vmatprep.subr.mxu0 0.0
        %1814 = vmatpush1.msra.mxu0 0.0
        %1815 = vmatprep.subr.mxu0 0.0
        %1816 = vmatpush1.msra.mxu0 0.0
        %1817 = vmatprep.subr.mxu0 0.0
        %1818 = vmatpush1.msra.mxu0 0.0
        %1819 = vmatprep.subr.mxu0 0.0
        %1820 = vmatpush1.msra.mxu0 0.0
        %1821 = vmatprep.subr.mxu0 0.0
        %1822 = vmatpush1.msra.mxu0 0.0
        %1823 = vmatprep.subr.mxu0 0.0
        %1824 = vmatpush1.msra.mxu0 0.0
        %1825 = vmatprep.subr.mxu0 0.0
        %1826 = vmatpush1.msra.mxu0 %v1713
        %1827 = vmatprep.subr.mxu0 0.0
        %1828 = vmatpush1.msra.mxu0 %v1712
        %1829 = vmatprep.subr.mxu0 0.0
        %1830 = vmatpush1.msra.mxu0 %v1711
        %1831 = vmatprep.subr.mxu0 0.0
        %1832 = vmatpush1.msra.mxu0 %v1710
        %1833 = vmatprep.subr.mxu0 0.0
        %1834 = vmatpush2.msra.mxu0 0.0
        %1835 = vmatprep.subr.mxu0 0.0
        %1836 = vmatpush2.msra.mxu0 0.0
        %1837 = vmatprep.subr.mxu0 0.0
        %1838 = vmatpush2.msra.mxu0 0.0
        %1839 = vmatprep.subr.mxu0 0.0
        %1840 = vmatpush2.msra.mxu0 0.0
        %1841 = vmatprep.subr.mxu0 0.0
        %1842 = vmatpush2.msra.mxu0 0.0
        %1843 = vmatprep.subr.mxu0 0.0
        %1844 = vmatpush2.msra.mxu0 0.0
        %1845 = vmatprep.subr.mxu0 0.0
        %1846 = vmatpush2.msra.mxu0 0.0
        %1847 = vmatprep.subr.mxu0 0.0
        %1848 = vmatpush2.msra.mxu0 0.0
        %1849 = vmatprep.subr.mxu0 0.0
        %1850 = vmatpush2.msra.mxu0 0.0
        %1851 = vmatprep.subr.mxu0 0.0
        %1852 = vmatpush2.msra.mxu0 0.0
        %1853 = vmatprep.subr.mxu0 0.0
        %1854 = vmatpush2.msra.mxu0 0.0
        %1855 = vmatprep.subr.mxu0 0.0
        %1856 = vmatpush2.msra.mxu0 0.0
        %1857 = vmatprep.subr.mxu0 0.0
        %1858 = vmatpush2.msra.mxu0 0.0
        %1859 = vmatprep.subr.mxu0 0.0
        %1860 = vmatpush2.msra.mxu0 0.0
        %1861 = vmatprep.subr.mxu0 0.0
        %1862 = vmatpush2.msra.mxu0 0.0
        %1863 = vmatprep.subr.mxu0 0.0
        %1864 = vmatpush2.msra.mxu0 0.0
        %1865 = vmatprep.mubr.f32.mxu0 0.0
        %1866 = vmatmul.mubr.f32.gmra.mxu0 %v1796
        %v1867 = vpop.f32.mrf.mxu0
        %v1868 = vadd.f32 0.0, %v1867
        %v1869 = vpop.f32.mrf.mxu0
        %1870 = vmatprep.mubr.f32.mxu0 0.0
        %1871 = vmatmul.mubr.f32.gmra.mxu0 %v1799
        %v1872 = vpop.f32.mrf.mxu0
        %v1873 = vadd.f32 0.0, %v1872
        %v1874 = vpop.f32.mrf.mxu0
        %1875 = vdwg.mxu0
        %v1877 = vsel %vm857, %v1674, 0
        %v1880 = vsel %vm857, %v1679, 0
        %1882 = vmatprep.subr.mxu0 0.0
        %1883 = vmatpush1.msra.mxu0 0.0
        %1884 = vmatprep.subr.mxu0 0.0
        %1885 = vmatpush1.msra.mxu0 0.0
        %1886 = vmatprep.subr.mxu0 0.0
        %1887 = vmatpush1.msra.mxu0 0.0
        %1888 = vmatprep.subr.mxu0 0.0
        %1889 = vmatpush1.msra.mxu0 0.0
        %1890 = vmatprep.subr.mxu0 0.0
        %1891 = vmatpush1.msra.mxu0 0.0
        %1892 = vmatprep.subr.mxu0 0.0
        %1893 = vmatpush1.msra.mxu0 0.0
        %1894 = vmatprep.subr.mxu0 0.0
        %1895 = vmatpush1.msra.mxu0 0.0
        %1896 = vmatprep.subr.mxu0 0.0
        %1897 = vmatpush1.msra.mxu0 0.0
        %1898 = vmatprep.subr.mxu0 0.0
        %1899 = vmatpush1.msra.mxu0 0.0
        %1900 = vmatprep.subr.mxu0 0.0
        %1901 = vmatpush1.msra.mxu0 0.0
        %1902 = vmatprep.subr.mxu0 0.0
        %1903 = vmatpush1.msra.mxu0 0.0
        %1904 = vmatprep.subr.mxu0 0.0
        %1905 = vmatpush1.msra.mxu0 0.0
        %1906 = vmatprep.subr.mxu0 0.0
        %1907 = vmatpush1.msra.mxu0 %v1705
        %1908 = vmatprep.subr.mxu0 0.0
        %1909 = vmatpush1.msra.mxu0 %v1704
        %1910 = vmatprep.subr.mxu0 0.0
        %1911 = vmatpush1.msra.mxu0 %v1703
        %1912 = vmatprep.subr.mxu0 0.0
        %1913 = vmatpush1.msra.mxu0 %v1702
        %1914 = vmatprep.subr.mxu0 0.0
        %1915 = vmatpush2.msra.mxu0 0.0
        %1916 = vmatprep.subr.mxu0 0.0
        %1917 = vmatpush2.msra.mxu0 0.0
        %1918 = vmatprep.subr.mxu0 0.0
        %1919 = vmatpush2.msra.mxu0 0.0
        %1920 = vmatprep.subr.mxu0 0.0
        %1921 = vmatpush2.msra.mxu0 0.0
        %1922 = vmatprep.subr.mxu0 0.0
        %1923 = vmatpush2.msra.mxu0 0.0
        %1924 = vmatprep.subr.mxu0 0.0
        %1925 = vmatpush2.msra.mxu0 0.0
        %1926 = vmatprep.subr.mxu0 0.0
        %1927 = vmatpush2.msra.mxu0 0.0
        %1928 = vmatprep.subr.mxu0 0.0
        %1929 = vmatpush2.msra.mxu0 0.0
        %1930 = vmatprep.subr.mxu0 0.0
        %1931 = vmatpush2.msra.mxu0 0.0
        %1932 = vmatprep.subr.mxu0 0.0
        %1933 = vmatpush2.msra.mxu0 0.0
        %1934 = vmatprep.subr.mxu0 0.0
        %1935 = vmatpush2.msra.mxu0 0.0
        %1936 = vmatprep.subr.mxu0 0.0
        %1937 = vmatpush2.msra.mxu0 0.0
        %1938 = vmatprep.subr.mxu0 0.0
        %1939 = vmatpush2.msra.mxu0 0.0
        %1940 = vmatprep.subr.mxu0 0.0
        %1941 = vmatpush2.msra.mxu0 0.0
        %1942 = vmatprep.subr.mxu0 0.0
        %1943 = vmatpush2.msra.mxu0 0.0
        %1944 = vmatprep.subr.mxu0 0.0
        %1945 = vmatpush2.msra.mxu0 0.0
        %1946 = vmatprep.mubr.f32.mxu0 0.0
        %1947 = vmatmul.mubr.f32.gmra.mxu0 %v1877
        %v1948 = vpop.f32.mrf.mxu0
        %v1949 = vadd.f32 %v1787, %v1948
        %v1950 = vpop.f32.mrf.mxu0
        %1951 = vmatprep.mubr.f32.mxu0 0.0
        %1952 = vmatmul.mubr.f32.gmra.mxu0 %v1880
        %v1953 = vpop.f32.mrf.mxu0
        %v1954 = vadd.f32 %v1792, %v1953
        %v1955 = vpop.f32.mrf.mxu0
        %1956 = vdwg.mxu0
        %v1957 = vadd.f32 %v1949, %v1868
        %v1958 = vadd.f32 %v1954, %v1873
        %v1959 = vlaneseq
        %v1960 = vshrl.u32 %v1959, 7
        %v1961 = vsub.s32 5, %v1960
        %v1962 = vrot.slane %v159, %v1961
        %v1963 = vadd.f32 %v1957, %v1962
        %v1964 = vadd.f32 %v1958, %v1962
        %v1965 = vmax.f32 %v1963, 0.0
        %v1966 = vmax.f32 %v1964, 0.0
        %1967 = vmatprep.subr.mxu0 0.0
        %1968 = vmatpush1.msra.mxu0 0.0
        %1969 = vmatprep.subr.mxu0 0.0
        %1970 = vmatpush1.msra.mxu0 0.0
        %1971 = vmatprep.subr.mxu0 0.0
        %1972 = vmatpush1.msra.mxu0 0.0
        %1973 = vmatprep.subr.mxu0 0.0
        %1974 = vmatpush1.msra.mxu0 0.0
        %1975 = vmatprep.subr.mxu0 0.0
        %1976 = vmatpush1.msra.mxu0 0.0
        %1977 = vmatprep.subr.mxu0 0.0
        %1978 = vmatpush1.msra.mxu0 0.0
        %1979 = vmatprep.subr.mxu0 0.0
        %1980 = vmatpush1.msra.mxu0 0.0
        %1981 = vmatprep.subr.mxu0 0.0
        %1982 = vmatpush1.msra.mxu0 0.0
        %1983 = vmatprep.subr.mxu0 0.0
        %1984 = vmatpush1.msra.mxu0 0.0
        %1985 = vmatprep.subr.mxu0 0.0
        %1986 = vmatpush1.msra.mxu0 0.0
        %1987 = vmatprep.subr.mxu0 0.0
        %1988 = vmatpush1.msra.mxu0 0.0
        %1989 = vmatprep.subr.mxu0 0.0
        %1990 = vmatpush1.msra.mxu0 0.0
        %1991 = vmatprep.subr.mxu0 0.0
        %1992 = vmatpush1.msra.mxu0 0.0
        %1993 = vmatprep.subr.mxu0 0.0
        %1994 = vmatpush1.msra.mxu0 0.0
        %1995 = vmatprep.subr.mxu0 0.0
        %1996 = vmatpush1.msra.mxu0 %v1966
        %1997 = vmatprep.subr.mxu0 0.0
        %1998 = vmatpush1.msra.mxu0 %v1965
        %1999 = vmatprep.subr.mxu0 0.0
        %2000 = vmatpush2.msra.mxu0 0.0
        %2001 = vmatprep.subr.mxu0 0.0
        %2002 = vmatpush2.msra.mxu0 0.0
        %2003 = vmatprep.subr.mxu0 0.0
        %2004 = vmatpush2.msra.mxu0 0.0
        %2005 = vmatprep.subr.mxu0 0.0
        %2006 = vmatpush2.msra.mxu0 0.0
        %2007 = vmatprep.subr.mxu0 0.0
        %2008 = vmatpush2.msra.mxu0 0.0
        %2009 = vmatprep.subr.mxu0 0.0
        %2010 = vmatpush2.msra.mxu0 0.0
        %2011 = vmatprep.subr.mxu0 0.0
        %2012 = vmatpush2.msra.mxu0 0.0
        %2013 = vmatprep.subr.mxu0 0.0
        %2014 = vmatpush2.msra.mxu0 0.0
        %2015 = vmatprep.subr.mxu0 0.0
        %2016 = vmatpush2.msra.mxu0 0.0
        %2017 = vmatprep.subr.mxu0 0.0
        %2018 = vmatpush2.msra.mxu0 0.0
        %2019 = vmatprep.subr.mxu0 0.0
        %2020 = vmatpush2.msra.mxu0 0.0
        %2021 = vmatprep.subr.mxu0 0.0
        %2022 = vmatpush2.msra.mxu0 0.0
        %2023 = vmatprep.subr.mxu0 0.0
        %2024 = vmatpush2.msra.mxu0 0.0
        %2025 = vmatprep.subr.mxu0 0.0
        %2026 = vmatpush2.msra.mxu0 0.0
        %2027 = vmatprep.subr.mxu0 0.0
        %2028 = vmatpush2.msra.mxu0 0.0
        %2029 = vmatprep.subr.mxu0 0.0
        %2030 = vmatpush2.msra.mxu0 0.0
        %2031 = vmatprep.mubr.f32.mxu0 0.0
        %2032 = vmatmul.mubr.f32.gmra.mxu0 %v170
        %v2033 = vpop.f32.mrf.mxu0
        %v2034 = vadd.f32 0.0, %v2033
        %v2035 = vpop.f32.mrf.mxu0
        %2036 = vmatprep.mubr.f32.mxu0 0.0
        %2037 = vmatmul.mubr.f32.gmra.mxu0 %v173
        %v2038 = vpop.f32.mrf.mxu0
        %v2039 = vadd.f32 0.0, %v2038
        %v2040 = vpop.f32.mrf.mxu0
        %2041 = vmatprep.mubr.f32.mxu0 0.0
        %2042 = vmatmul.mubr.f32.gmra.mxu0 %v176
        %v2043 = vpop.f32.mrf.mxu0
        %v2044 = vadd.f32 0.0, %v2043
        %v2045 = vpop.f32.mrf.mxu0
        %2046 = vmatprep.mubr.f32.mxu0 0.0
        %2047 = vmatmul.mubr.f32.gmra.mxu0 %v179
        %v2048 = vpop.f32.mrf.mxu0
        %v2049 = vadd.f32 0.0, %v2048
        %v2050 = vpop.f32.mrf.mxu0
        %2051 = vmatprep.mubr.f32.mxu0 0.0
        %2052 = vmatmul.mubr.f32.gmra.mxu0 %v182
        %v2053 = vpop.f32.mrf.mxu0
        %v2054 = vadd.f32 0.0, %v2053
        %v2055 = vpop.f32.mrf.mxu0
        %2056 = vmatprep.mubr.f32.mxu0 0.0
        %2057 = vmatmul.mubr.f32.gmra.mxu0 %v185
        %v2058 = vpop.f32.mrf.mxu0
        %v2059 = vadd.f32 0.0, %v2058
        %v2060 = vpop.f32.mrf.mxu0
        %2061 = vdwg.mxu0
        %v2062 = vld [vmem:[#allocation2 + $0x220] sm:$0xff]
        %v2063 = vld [vmem:[#allocation2 + $0x228] sm:$0xff]
        %v2064 = vld [vmem:[#allocation2 + $0x230] sm:$0xff]
        %v2065 = vld [vmem:[#allocation2 + $0x238] sm:$0xff]
        %v2066 = vld [vmem:[#allocation2 + $0x240] sm:$0xff]
        %v2067 = vld [vmem:[#allocation2 + $0x248] sm:$0xff]
        %v2069 = vsel %vm168, %v2044, 0
        %v2072 = vsel %vm168, %v2049, 0
        %2074 = vmatprep.subr.mxu0 0.0
        %2075 = vmatpush1.msra.mxu0 0.0
        %2076 = vmatprep.subr.mxu0 0.0
        %2077 = vmatpush1.msra.mxu0 0.0
        %2078 = vmatprep.subr.mxu0 0.0
        %2079 = vmatpush1.msra.mxu0 0.0
        %2080 = vmatprep.subr.mxu0 0.0
        %2081 = vmatpush1.msra.mxu0 0.0
        %2082 = vmatprep.subr.mxu0 0.0
        %2083 = vmatpush1.msra.mxu0 0.0
        %2084 = vmatprep.subr.mxu0 0.0
        %2085 = vmatpush1.msra.mxu0 0.0
        %2086 = vmatprep.subr.mxu0 0.0
        %2087 = vmatpush1.msra.mxu0 0.0
        %2088 = vmatprep.subr.mxu0 0.0
        %2089 = vmatpush1.msra.mxu0 0.0
        %2090 = vmatprep.subr.mxu0 0.0
        %2091 = vmatpush1.msra.mxu0 0.0
        %2092 = vmatprep.subr.mxu0 0.0
        %2093 = vmatpush1.msra.mxu0 0.0
        %2094 = vmatprep.subr.mxu0 0.0
        %2095 = vmatpush1.msra.mxu0 0.0
        %2096 = vmatprep.subr.mxu0 0.0
        %2097 = vmatpush1.msra.mxu0 0.0
        %2098 = vmatprep.subr.mxu0 0.0
        %2099 = vmatpush1.msra.mxu0 0.0
        %2100 = vmatprep.subr.mxu0 0.0
        %2101 = vmatpush1.msra.mxu0 0.0
        %2102 = vmatprep.subr.mxu0 0.0
        %2103 = vmatpush1.msra.mxu0 %v2065
        %2104 = vmatprep.subr.mxu0 0.0
        %2105 = vmatpush1.msra.mxu0 %v2064
        %2106 = vmatprep.subr.mxu0 0.0
        %2107 = vmatpush2.msra.mxu0 0.0
        %2108 = vmatprep.subr.mxu0 0.0
        %2109 = vmatpush2.msra.mxu0 0.0
        %2110 = vmatprep.subr.mxu0 0.0
        %2111 = vmatpush2.msra.mxu0 0.0
        %2112 = vmatprep.subr.mxu0 0.0
        %2113 = vmatpush2.msra.mxu0 0.0
        %2114 = vmatprep.subr.mxu0 0.0
        %2115 = vmatpush2.msra.mxu0 0.0
        %2116 = vmatprep.subr.mxu0 0.0
        %2117 = vmatpush2.msra.mxu0 0.0
        %2118 = vmatprep.subr.mxu0 0.0
        %2119 = vmatpush2.msra.mxu0 0.0
        %2120 = vmatprep.subr.mxu0 0.0
        %2121 = vmatpush2.msra.mxu0 0.0
        %2122 = vmatprep.subr.mxu0 0.0
        %2123 = vmatpush2.msra.mxu0 0.0
        %2124 = vmatprep.subr.mxu0 0.0
        %2125 = vmatpush2.msra.mxu0 0.0
        %2126 = vmatprep.subr.mxu0 0.0
        %2127 = vmatpush2.msra.mxu0 0.0
        %2128 = vmatprep.subr.mxu0 0.0
        %2129 = vmatpush2.msra.mxu0 0.0
        %2130 = vmatprep.subr.mxu0 0.0
        %2131 = vmatpush2.msra.mxu0 0.0
        %2132 = vmatprep.subr.mxu0 0.0
        %2133 = vmatpush2.msra.mxu0 0.0
        %2134 = vmatprep.subr.mxu0 0.0
        %2135 = vmatpush2.msra.mxu0 0.0
        %2136 = vmatprep.subr.mxu0 0.0
        %2137 = vmatpush2.msra.mxu0 0.0
        %2138 = vmatprep.mubr.f32.mxu0 0.0
        %2139 = vmatmul.mubr.f32.gmra.mxu0 %v2069
        %v2140 = vpop.f32.mrf.mxu0
        %v2141 = vadd.f32 0.0, %v2140
        %v2142 = vpop.f32.mrf.mxu0
        %2143 = vmatprep.mubr.f32.mxu0 0.0
        %2144 = vmatmul.mubr.f32.gmra.mxu0 %v2072
        %v2145 = vpop.f32.mrf.mxu0
        %v2146 = vadd.f32 0.0, %v2145
        %v2147 = vpop.f32.mrf.mxu0
        %2148 = vdwg.mxu0
        %v2150 = vsel %vm168, %v2054, 0
        %v2153 = vsel %vm168, %v2059, 0
        %2155 = vmatprep.subr.mxu0 0.0
        %2156 = vmatpush1.msra.mxu0 0.0
        %2157 = vmatprep.subr.mxu0 0.0
        %2158 = vmatpush1.msra.mxu0 0.0
        %2159 = vmatprep.subr.mxu0 0.0
        %2160 = vmatpush1.msra.mxu0 0.0
        %2161 = vmatprep.subr.mxu0 0.0
        %2162 = vmatpush1.msra.mxu0 0.0
        %2163 = vmatprep.subr.mxu0 0.0
        %2164 = vmatpush1.msra.mxu0 0.0
        %2165 = vmatprep.subr.mxu0 0.0
        %2166 = vmatpush1.msra.mxu0 0.0
        %2167 = vmatprep.subr.mxu0 0.0
        %2168 = vmatpush1.msra.mxu0 0.0
        %2169 = vmatprep.subr.mxu0 0.0
        %2170 = vmatpush1.msra.mxu0 0.0
        %2171 = vmatprep.subr.mxu0 0.0
        %2172 = vmatpush1.msra.mxu0 0.0
        %2173 = vmatprep.subr.mxu0 0.0
        %2174 = vmatpush1.msra.mxu0 0.0
        %2175 = vmatprep.subr.mxu0 0.0
        %2176 = vmatpush1.msra.mxu0 0.0
        %2177 = vmatprep.subr.mxu0 0.0
        %2178 = vmatpush1.msra.mxu0 0.0
        %2179 = vmatprep.subr.mxu0 0.0
        %2180 = vmatpush1.msra.mxu0 0.0
        %2181 = vmatprep.subr.mxu0 0.0
        %2182 = vmatpush1.msra.mxu0 0.0
        %2183 = vmatprep.subr.mxu0 0.0
        %2184 = vmatpush1.msra.mxu0 %v2067
        %2185 = vmatprep.subr.mxu0 0.0
        %2186 = vmatpush1.msra.mxu0 %v2066
        %2187 = vmatprep.subr.mxu0 0.0
        %2188 = vmatpush2.msra.mxu0 0.0
        %2189 = vmatprep.subr.mxu0 0.0
        %2190 = vmatpush2.msra.mxu0 0.0
        %2191 = vmatprep.subr.mxu0 0.0
        %2192 = vmatpush2.msra.mxu0 0.0
        %2193 = vmatprep.subr.mxu0 0.0
        %2194 = vmatpush2.msra.mxu0 0.0
        %2195 = vmatprep.subr.mxu0 0.0
        %2196 = vmatpush2.msra.mxu0 0.0
        %2197 = vmatprep.subr.mxu0 0.0
        %2198 = vmatpush2.msra.mxu0 0.0
        %2199 = vmatprep.subr.mxu0 0.0
        %2200 = vmatpush2.msra.mxu0 0.0
        %2201 = vmatprep.subr.mxu0 0.0
        %2202 = vmatpush2.msra.mxu0 0.0
        %2203 = vmatprep.subr.mxu0 0.0
        %2204 = vmatpush2.msra.mxu0 0.0
        %2205 = vmatprep.subr.mxu0 0.0
        %2206 = vmatpush2.msra.mxu0 0.0
        %2207 = vmatprep.subr.mxu0 0.0
        %2208 = vmatpush2.msra.mxu0 0.0
        %2209 = vmatprep.subr.mxu0 0.0
        %2210 = vmatpush2.msra.mxu0 0.0
        %2211 = vmatprep.subr.mxu0 0.0
        %2212 = vmatpush2.msra.mxu0 0.0
        %2213 = vmatprep.subr.mxu0 0.0
        %2214 = vmatpush2.msra.mxu0 0.0
        %2215 = vmatprep.subr.mxu0 0.0
        %2216 = vmatpush2.msra.mxu0 0.0
        %2217 = vmatprep.subr.mxu0 0.0
        %2218 = vmatpush2.msra.mxu0 0.0
        %2219 = vmatprep.mubr.f32.mxu0 0.0
        %2220 = vmatmul.mubr.f32.gmra.mxu0 %v2150
        %v2221 = vpop.f32.mrf.mxu0
        %v2222 = vadd.f32 0.0, %v2221
        %v2223 = vpop.f32.mrf.mxu0
        %2224 = vmatprep.mubr.f32.mxu0 0.0
        %2225 = vmatmul.mubr.f32.gmra.mxu0 %v2153
        %v2226 = vpop.f32.mrf.mxu0
        %v2227 = vadd.f32 0.0, %v2226
        %v2228 = vpop.f32.mrf.mxu0
        %2229 = vdwg.mxu0
        %v2231 = vsel %vm168, %v2034, 0
        %v2234 = vsel %vm168, %v2039, 0
        %2236 = vmatprep.subr.mxu0 0.0
        %2237 = vmatpush1.msra.mxu0 0.0
        %2238 = vmatprep.subr.mxu0 0.0
        %2239 = vmatpush1.msra.mxu0 0.0
        %2240 = vmatprep.subr.mxu0 0.0
        %2241 = vmatpush1.msra.mxu0 0.0
        %2242 = vmatprep.subr.mxu0 0.0
        %2243 = vmatpush1.msra.mxu0 0.0
        %2244 = vmatprep.subr.mxu0 0.0
        %2245 = vmatpush1.msra.mxu0 0.0
        %2246 = vmatprep.subr.mxu0 0.0
        %2247 = vmatpush1.msra.mxu0 0.0
        %2248 = vmatprep.subr.mxu0 0.0
        %2249 = vmatpush1.msra.mxu0 0.0
        %2250 = vmatprep.subr.mxu0 0.0
        %2251 = vmatpush1.msra.mxu0 0.0
        %2252 = vmatprep.subr.mxu0 0.0
        %2253 = vmatpush1.msra.mxu0 0.0
        %2254 = vmatprep.subr.mxu0 0.0
        %2255 = vmatpush1.msra.mxu0 0.0
        %2256 = vmatprep.subr.mxu0 0.0
        %2257 = vmatpush1.msra.mxu0 0.0
        %2258 = vmatprep.subr.mxu0 0.0
        %2259 = vmatpush1.msra.mxu0 0.0
        %2260 = vmatprep.subr.mxu0 0.0
        %2261 = vmatpush1.msra.mxu0 0.0
        %2262 = vmatprep.subr.mxu0 0.0
        %2263 = vmatpush1.msra.mxu0 0.0
        %2264 = vmatprep.subr.mxu0 0.0
        %2265 = vmatpush1.msra.mxu0 %v2063
        %2266 = vmatprep.subr.mxu0 0.0
        %2267 = vmatpush1.msra.mxu0 %v2062
        %2268 = vmatprep.subr.mxu0 0.0
        %2269 = vmatpush2.msra.mxu0 0.0
        %2270 = vmatprep.subr.mxu0 0.0
        %2271 = vmatpush2.msra.mxu0 0.0
        %2272 = vmatprep.subr.mxu0 0.0
        %2273 = vmatpush2.msra.mxu0 0.0
        %2274 = vmatprep.subr.mxu0 0.0
        %2275 = vmatpush2.msra.mxu0 0.0
        %2276 = vmatprep.subr.mxu0 0.0
        %2277 = vmatpush2.msra.mxu0 0.0
        %2278 = vmatprep.subr.mxu0 0.0
        %2279 = vmatpush2.msra.mxu0 0.0
        %2280 = vmatprep.subr.mxu0 0.0
        %2281 = vmatpush2.msra.mxu0 0.0
        %2282 = vmatprep.subr.mxu0 0.0
        %2283 = vmatpush2.msra.mxu0 0.0
        %2284 = vmatprep.subr.mxu0 0.0
        %2285 = vmatpush2.msra.mxu0 0.0
        %2286 = vmatprep.subr.mxu0 0.0
        %2287 = vmatpush2.msra.mxu0 0.0
        %2288 = vmatprep.subr.mxu0 0.0
        %2289 = vmatpush2.msra.mxu0 0.0
        %2290 = vmatprep.subr.mxu0 0.0
        %2291 = vmatpush2.msra.mxu0 0.0
        %2292 = vmatprep.subr.mxu0 0.0
        %2293 = vmatpush2.msra.mxu0 0.0
        %2294 = vmatprep.subr.mxu0 0.0
        %2295 = vmatpush2.msra.mxu0 0.0
        %2296 = vmatprep.subr.mxu0 0.0
        %2297 = vmatpush2.msra.mxu0 0.0
        %2298 = vmatprep.subr.mxu0 0.0
        %2299 = vmatpush2.msra.mxu0 0.0
        %2300 = vmatprep.mubr.f32.mxu0 0.0
        %2301 = vmatmul.mubr.f32.gmra.mxu0 %v2231
        %v2302 = vpop.f32.mrf.mxu0
        %v2303 = vadd.f32 %v2141, %v2302
        %v2304 = vpop.f32.mrf.mxu0
        %2305 = vmatprep.mubr.f32.mxu0 0.0
        %2306 = vmatmul.mubr.f32.gmra.mxu0 %v2234
        %v2307 = vpop.f32.mrf.mxu0
        %v2308 = vadd.f32 %v2146, %v2307
        %v2309 = vpop.f32.mrf.mxu0
        %2310 = vdwg.mxu0
        %v2311 = vadd.f32 %v2303, %v2222
        %v2312 = vadd.f32 %v2308, %v2227
        %vm2313 = vcmask 23552
        %2314 = vst.msk [vmem:[%s158] sm:$0xff] %vm2313, %v2311
        %2315 = vst.msk [vmem:[%s158 + $0x8] sm:$0xff] %vm2313, %v2312
        %p2316 = scmp.lt.s32.totalorder %s14, 1
        %s2317 = scalar_select %p2316, %s14, 1
        %s2318 = smul.addr %s2317, 2
        %s2319 = smul.addr %s2318, 8
        %s2320 = scalar_lea.vmem %s2, %s2319
        // Predicated region
        $region33: #{tpu_custom_call.1} parent=27 // pred_check
          %p2321 = pneg %p79
        $region34: #{tpu_custom_call.1} parent=27 // pred_check_branch
          %2323 = sbr.rel (%p2321) target = $region36
        $region35: #{tpu_custom_call.1} parent=27 // pred_region
          _
        $region36: #{tpu_custom_call.1} parent=27 // pred_fallthru
          _
      $region28: #{tpu_custom_call.1} parent=5 // pred_fallthru
        _
      %p2324 = scmp.le.s32.totalorder 2, %s9
      // Predicated region
      $region37: #{tpu_custom_call.1} parent=5 // pred_check
        %p2325 = pneg %p2324
      $region38: #{tpu_custom_call.1} parent=5 // pred_check_branch
        %2327 = sbr.rel (%p2325) target = $region40
      $region39: #{tpu_custom_call.1} parent=5 // pred_region
        %s2328 = ssub.s32 %s9, 2
        // Predicated region
        $region41: #{tpu_custom_call.1} parent=39 // pred_check
          %p2329 = pneg %p85
        $region42: #{tpu_custom_call.1} parent=39 // pred_check_branch
          %2331 = sbr.rel (%p2329) target = $region44
        $region43: #{tpu_custom_call.1} parent=39 // pred_region
          %p2332 = scmp.lt.s32.totalorder %s15, 1
          %s2333 = scalar_select %p2332, %s15, 1
          %s2334 = smul.addr %s2333, 2
          %s2335 = smul.addr %s2334, 8
          %s2336 = scalar_lea.vmem %s2, %s2335
        $region44: #{tpu_custom_call.1} parent=39 // pred_fallthru
          _
      $region40: #{tpu_custom_call.1} parent=5 // pred_fallthru
        _
    $region6: #{tpu_custom_call.1} parent=1 // loop_footer
      %s13 = sadd.s32 1, %s9
    $region7: #{tpu_custom_call.1} parent=1 // loop_footer_branch
      %8 = sbr.rel target = $region3
    $region8: #{tpu_custom_call.1} parent=1 // loop_exit
      _
    %2337 = vsyncpa [#allocation3], 1
    %s2338 = scalar_lea.sflag [#allocation3], 1
    %2339 = vsyncpa %s2338, 1

</llo_original>
